<compile_context>
chip_gen: v5e
topology: v5e:2x2
jax: 0.10.0
libtpu: 0.0.40
codegen_flags: <defaults>
</compile_context>

<pallas_src>
import jax
import jax.numpy as jnp
from jax.experimental import pallas as pl
from jax.experimental.pallas import tpu as pltpu

NEG_MAX = float(jnp.finfo(jnp.float32).max)  # torch.finfo(f32).max


def _layernorm(x, gamma, beta, eps=1e-5):
    mu = jnp.mean(x, axis=-1, keepdims=True)
    var = jnp.mean(jnp.square(x - mu), axis=-1, keepdims=True)
    return (x - mu) * jax.lax.rsqrt(var + eps) * gamma + beta


# ---------------------------------------------------------------------------
# Fused kernel: LayerNorm + masked cross-attention + gated residual
#               + LayerNorm + FF (GELU) + gated residual, per (batch, seq-tile).
# ---------------------------------------------------------------------------
def _gated_xattn_ff_kernel(x_ref, media_ref, tt_ref, mreq_ref,
                           g1_ref, b1_ref, wq_ref, wk_ref, wv_ref, wo_ref,
                           g2_ref, b2_ref, w1_ref, w2_ref, out_ref):
    f32, bf16 = jnp.float32, jnp.bfloat16

    x = x_ref[0]                                    # (bn, D)  float32
    media = media_ref[0]                            # (TM, D)  bfloat16
    H = wq_ref.shape[0]
    bn, D = x.shape
    TM = media.shape[0]

    # ---------------- masked cross attention ----------------
    xn = _layernorm(x, g1_ref[0], b1_ref[0]).astype(bf16)

    # leading-batch (head) views of the activations; weights are already (H, D, Dh)
    xn_b = jnp.broadcast_to(xn[None], (H, bn, D))
    med_b = jnp.broadcast_to(media[None], (H, TM, D))

    # per-head projections as batched MXU matmuls (1/sqrt(Dh) folded into Wq)
    q = jnp.einsum('hnd,hde->hne', xn_b, wq_ref[...], preferred_element_type=f32)
    k = jnp.einsum('hmd,hde->hme', med_b, wk_ref[...], preferred_element_type=f32)
    v = jnp.einsum('hmd,hde->hme', med_b, wv_ref[...], preferred_element_type=f32)

    # scores: contract last dims, batch over heads (no K transpose materialized)
    s = jnp.einsum('hne,hme->hnm', q.astype(bf16), k.astype(bf16),
                   preferred_element_type=f32)      # (H, bn, TM) f32

    # mask rebuilt in-kernel from int32 scalars; matches torch.ge text mask AND
    # aug_exist mask (missing augs get a sentinel > any cumsum). Fully-masked rows
    # become a uniform softmax, identical to the PyTorch reference behavior.
    keep = tt_ref[0] >= mreq_ref[0]                 # (bn, 1) >= (1, TM) -> (bn, TM)
    s = jnp.where(keep[None, :, :], s, -NEG_MAX)
    s = s - jnp.max(s, axis=-1, keepdims=True)
    p = jnp.exp(s)
    p = p * pl.reciprocal(jnp.sum(p, axis=-1, keepdims=True), approx=True)

    o = jnp.einsum('hnm,hme->hne', p.astype(bf16), v.astype(bf16),
                   preferred_element_type=f32)      # (H, bn, Dh)
    # output projection; tanh(attn_gate) already folded into Wo
    proj = jnp.einsum('hne,hec->hnc', o.astype(bf16), wo_ref[...],
                      preferred_element_type=f32)   # (H, bn, D)
    x1 = jnp.sum(proj, axis=0) + x                  # gated residual (gate folded)

    # ---------------- gated feed-forward ----------------
    xn2 = _layernorm(x1, g2_ref[0], b2_ref[0]).astype(bf16)
    h = jnp.dot(xn2, w1_ref[...], preferred_element_type=f32)          # (bn, Dff)
    h = 0.5 * h * (1.0 + jax.lax.erf(h * 0.7071067811865476))          # exact GELU
    y = jnp.dot(h.astype(bf16), w2_ref[...], preferred_element_type=f32)
    out_ref[0] = (y + x1).astype(out_ref.dtype)     # tanh(ff_gate) folded into W2


# ---------------------------------------------------------------------------
# Wrapper
# ---------------------------------------------------------------------------
def gated_cross_attention_block(x, media, media_locations, aug_exist_idx, params,
                                *, heads, dim_head):
    B, N, D = x.shape
    _, T, M, _ = media.shape
    TM = T * M
    Dff = params["w1"].shape[1]
    scale = dim_head ** -0.5
    bf16 = jnp.bfloat16

    # sequence tile (full N for small sequences, 128..512 multiples otherwise)
    bn = N
    for cand in (512, 256, 128):
        if N >= cand and N % cand == 0:
            bn = cand
            break

    media_flat = media.reshape(B, TM, D).astype(bf16)

    # int32 mask scalars (built once on host, mask itself is built in-kernel)
    text_time = jnp.cumsum(media_locations.astype(jnp.int32), axis=-1)[..., None]  # (B,N,1)
    media_time = jnp.repeat(jnp.arange(1, T + 1, dtype=jnp.int32), M)              # (TM,)
    aug_exp = jnp.repeat(aug_exist_idx.astype(jnp.int32), M, axis=-1)              # (B,TM)
    media_req = jnp.where(aug_exp == 1, media_time[None, :],
                          jnp.int32(N + T + 2))[:, None, :]                        # (B,1,TM)

    attn_gate = jnp.tanh(jnp.asarray(params["attn_gate"], jnp.float32)).reshape(())
    ff_gate = jnp.tanh(jnp.asarray(params["ff_gate"], jnp.float32)).reshape(())

    # fold scale / gates into the weights, reshape per-head, cast matmul operands to bf16
    wq_h = (params["wq"] * scale).reshape(D, heads, dim_head).transpose(1, 0, 2).astype(bf16)
    wk_h = params["wk"].reshape(D, heads, dim_head).transpose(1, 0, 2).astype(bf16)
    wv_h = params["wv"].reshape(D, heads, dim_head).transpose(1, 0, 2).astype(bf16)
    wo_h = (params["wo"] * attn_gate).reshape(heads, dim_head, D).astype(bf16)
    w1 = params["w1"].astype(bf16)
    w2 = (params["w2"] * ff_gate).astype(bf16)

    g1 = params["attn_ln_g"].reshape(1, D).astype(jnp.float32)
    b1 = params["attn_ln_b"].reshape(1, D).astype(jnp.float32)
    g2 = params["ff_ln_g"].reshape(1, D).astype(jnp.float32)
    b2 = params["ff_ln_b"].reshape(1, D).astype(jnp.float32)

    return pl.pallas_call(
        _gated_xattn_ff_kernel,
        out_shape=jax.ShapeDtypeStruct((B, N, D), jnp.float32),
        grid=(B, N // bn),
        in_specs=[
            pl.BlockSpec((1, bn, D), lambda b, i: (b, i, 0)),             # x (f32)
            pl.BlockSpec((1, TM, D), lambda b, i: (b, 0, 0)),             # media (bf16)
            pl.BlockSpec((1, bn, 1), lambda b, i: (b, i, 0)),             # text_time (i32)
            pl.BlockSpec((1, 1, TM), lambda b, i: (b, 0, 0)),             # media_req (i32)
            pl.BlockSpec((1, D), lambda b, i: (0, 0)),                    # attn LN gamma
            pl.BlockSpec((1, D), lambda b, i: (0, 0)),                    # attn LN beta
            pl.BlockSpec((heads, D, dim_head), lambda b, i: (0, 0, 0)),   # Wq (scaled)
            pl.BlockSpec((heads, D, dim_head), lambda b, i: (0, 0, 0)),   # Wk
            pl.BlockSpec((heads, D, dim_head), lambda b, i: (0, 0, 0)),   # Wv
            pl.BlockSpec((heads, dim_head, D), lambda b, i: (0, 0, 0)),   # Wo (gated)
            pl.BlockSpec((1, D), lambda b, i: (0, 0)),                    # ff LN gamma
            pl.BlockSpec((1, D), lambda b, i: (0, 0)),                    # ff LN beta
            pl.BlockSpec((D, Dff), lambda b, i: (0, 0)),                  # W1
            pl.BlockSpec((Dff, D), lambda b, i: (0, 0)),                  # W2 (gated)
        ],
        out_specs=pl.BlockSpec((1, bn, D), lambda b, i: (b, i, 0)),
        compiler_params=pltpu.CompilerParams(
            dimension_semantics=("parallel", "parallel"),
            vmem_limit_bytes=64 * 1024 * 1024,
        ),
    )(x.astype(jnp.float32), media_flat, text_time, media_req, g1, b1,
      wq_h, wk_h, wv_h, wo_h, g2, b2, w1, w2)


# ---------------------------------------------------------------------------
# Pure-JAX f32 reference (mirrors the PyTorch forward) for a correctness check
# ---------------------------------------------------------------------------
def reference(x, media, media_locations, aug_exist_idx, params, heads, dim_head):
    B, N, D = x.shape
    _, T, M, _ = media.shape
    TM = T * M

    xn = _layernorm(x, params["attn_ln_g"], params["attn_ln_b"])
    q = xn @ params["wq"]
    mf = media.reshape(B, TM, D)
    k = mf @ params["wk"]
    v = mf @ params["wv"]
    q = q.reshape(B, N, heads, dim_head).transpose(0, 2, 1, 3) * (dim_head ** -0.5)
    k = k.reshape(B, TM, heads, dim_head).transpose(0, 2, 1, 3)
    v = v.reshape(B, TM, heads, dim_head).transpose(0, 2, 1, 3)
    sim = jnp.einsum("bhid,bhjd->bhij", q, k)

    # only_attend_immediate_media=False -> torch.ge; then aug_exist mask
    text_time = jnp.cumsum(media_locations.astype(jnp.int32), axis=-1)
    media_time = jnp.repeat(jnp.arange(1, T + 1, dtype=jnp.int32), M)
    m_text = text_time[:, None, :, None] >= media_time[None, None, None, :]
    m_aug = (jnp.repeat(aug_exist_idx, M, axis=-1) == 1)[:, None, None, :]
    sim = jnp.where(m_text, sim, -NEG_MAX)
    sim = jnp.where(m_aug, sim, -NEG_MAX)
    sim = sim - jnp.max(sim, axis=-1, keepdims=True)
    attn = jax.nn.softmax(sim, axis=-1)
    # NOTE: the PyTorch `attn.masked_fill(...)` no-op branch only triggers when
    # only_attend_immediate_media=True, which is False here -> nothing to reproduce.
    out = jnp.einsum("bhij,bhjd->bhid", attn, v)
    out = out.transpose(0, 2, 1, 3).reshape(B, N, heads * dim_head)
    out = out @ params["wo"]
    x = out * jnp.tanh(params["attn_gate"]) + x

    xn = _layernorm(x, params["ff_ln_g"], params["ff_ln_b"])
    h = xn @ params["w1"]
    h = 0.5 * h * (1.0 + jax.lax.erf(h * 0.7071067811865476))
    y = h @ params["w2"]
    x = y * jnp.tanh(params["ff_gate"]) + x
    return x


if __name__ == "__main__":
    B, N, D = 2, 8, 32
    T, M = 2, 4
    heads, dim_head = 4, 8
    ff_mult = 4
    inner = heads * dim_head

    key = jax.random.PRNGKey(0)
    ks = jax.random.split(key, 10)
    s = 0.05
    params = dict(
        attn_ln_g=jnp.ones((D,), jnp.float32),
        attn_ln_b=jnp.zeros((D,), jnp.float32),
        wq=jax.random.normal(ks[0], (D, inner), jnp.float32) * s,
        wk=jax.random.normal(ks[1], (D, inner), jnp.float32) * s,
        wv=jax.random.normal(ks[2], (D, inner), jnp.float32) * s,
        wo=jax.random.normal(ks[3], (inner, D), jnp.float32) * s,
        # __init__ sets the gates to 0.0 (which zeroes both branches); use nonzero
        # values so the kernel math is actually exercised by the check.
        attn_gate=jnp.array([0.7], jnp.float32),
        ff_ln_g=jnp.ones((D,), jnp.float32),
        ff_ln_b=jnp.zeros((D,), jnp.float32),
        w1=jax.random.normal(ks[4], (D, D * ff_mult), jnp.float32) * s,
        w2=jax.random.normal(ks[5], (D * ff_mult, D), jnp.float32) * s,
        ff_gate=jnp.array([-0.4], jnp.float32),
    )

    x = jax.random.normal(ks[6], (B, N, D), jnp.float32)
    media = jax.random.normal(ks[7], (B, T, M, D), jnp.float32)
    media_locations = jax.random.bernoulli(ks[8], 0.4, (B, N))
    aug_exist_idx = jnp.array([[1, 1], [1, 0]], jnp.int32)

    out = gated_cross_attention_block(x, media, media_locations, aug_exist_idx,
                                      params, heads=heads, dim_head=dim_head)
    out = jax.block_until_ready(out)

    ref = reference(x, media, media_locations, aug_exist_idx, params, heads, dim_head)
    assert out.shape == (B, N, D)
    # bf16 MXU operands + approx reciprocal -> relaxed tolerance vs the f32 reference
    assert jnp.allclose(out, ref, atol=2e-2, rtol=2e-2), float(jnp.max(jnp.abs(out - ref)))
    print("KERNEL_OK")
</pallas_src>

<mosaic_0001>
module attributes {stable_mosaic.version = 11 : i64} {
  func.func @_gated_xattn_ff_kernel(%arg0: i32, %arg1: i32, %arg2: memref<1x8x32xf32, #tpu.memory_space<vmem>>, %arg3: memref<1x8x32xbf16, #tpu.memory_space<vmem>>, %arg4: memref<1x8x1xi32, #tpu.memory_space<vmem>>, %arg5: memref<1x1x8xi32, #tpu.memory_space<vmem>>, %arg6: memref<1x32xf32, #tpu.memory_space<vmem>>, %arg7: memref<1x32xf32, #tpu.memory_space<vmem>>, %arg8: memref<4x32x8xbf16, #tpu.memory_space<vmem>>, %arg9: memref<4x32x8xbf16, #tpu.memory_space<vmem>>, %arg10: memref<4x32x8xbf16, #tpu.memory_space<vmem>>, %arg11: memref<4x8x32xbf16, #tpu.memory_space<vmem>>, %arg12: memref<1x32xf32, #tpu.memory_space<vmem>>, %arg13: memref<1x32xf32, #tpu.memory_space<vmem>>, %arg14: memref<32x128xbf16, #tpu.memory_space<vmem>>, %arg15: memref<128x32xbf16, #tpu.memory_space<vmem>>, %arg16: memref<1x8x32xf32, #tpu.memory_space<vmem>>) attributes {dimension_semantics = [#tpu.dimension_semantics<parallel>, #tpu.dimension_semantics<parallel>], iteration_bounds = array<i64: 2, 1>, scalar_prefetch = 0 : i64, scratch_operands = 0 : i64, tpu.core_type = #tpu.core_type<tc>, window_params = [{transform_indices = @transform_0, window_bounds = array<i64: 1, 8, 32>}, {transform_indices = @transform_1, window_bounds = array<i64: 1, 8, 32>}, {transform_indices = @transform_2, window_bounds = array<i64: 1, 8, 1>}, {transform_indices = @transform_3, window_bounds = array<i64: 1, 1, 8>}, {pipeline_mode = #tpu.pipeline_mode<synchronous>, transform_indices = @transform_4, window_bounds = array<i64: 1, 32>}, {pipeline_mode = #tpu.pipeline_mode<synchronous>, transform_indices = @transform_5, window_bounds = array<i64: 1, 32>}, {pipeline_mode = #tpu.pipeline_mode<synchronous>, transform_indices = @transform_6, window_bounds = array<i64: 4, 32, 8>}, {pipeline_mode = #tpu.pipeline_mode<synchronous>, transform_indices = @transform_7, window_bounds = array<i64: 4, 32, 8>}, {pipeline_mode = #tpu.pipeline_mode<synchronous>, transform_indices = @transform_8, window_bounds = array<i64: 4, 32, 8>}, {pipeline_mode = #tpu.pipeline_mode<synchronous>, transform_indices = @transform_9, window_bounds = array<i64: 4, 8, 32>}, {pipeline_mode = #tpu.pipeline_mode<synchronous>, transform_indices = @transform_10, window_bounds = array<i64: 1, 32>}, {pipeline_mode = #tpu.pipeline_mode<synchronous>, transform_indices = @transform_11, window_bounds = array<i64: 1, 32>}, {pipeline_mode = #tpu.pipeline_mode<synchronous>, transform_indices = @transform_12, window_bounds = array<i64: 32, 128>}, {pipeline_mode = #tpu.pipeline_mode<synchronous>, transform_indices = @transform_13, window_bounds = array<i64: 128, 32>}, {transform_indices = @transform_14, window_bounds = array<i64: 1, 8, 32>}]} {
    %c0 = arith.constant 0 : index
    %c0_0 = arith.constant 0 : index
    %c0_1 = arith.constant 0 : index
    %0 = vector.load %arg2[%c0, %c0_0, %c0_1] : memref<1x8x32xf32, #tpu.memory_space<vmem>>, vector<1x8x32xf32>
    %1 = vector.shape_cast %0 : vector<1x8x32xf32> to vector<8x32xf32>
    %c0_2 = arith.constant 0 : index
    %c0_3 = arith.constant 0 : index
    %c0_4 = arith.constant 0 : index
    %2 = vector.load %arg3[%c0_2, %c0_3, %c0_4] : memref<1x8x32xbf16, #tpu.memory_space<vmem>>, vector<1x8x32xbf16>
    %3 = vector.shape_cast %2 : vector<1x8x32xbf16> to vector<8x32xbf16>
    %c0_5 = arith.constant 0 : index
    %c0_6 = arith.constant 0 : index
    %4 = vector.load %arg6[%c0_5, %c0_6] : memref<1x32xf32, #tpu.memory_space<vmem>>, vector<1x32xf32>
    %5 = vector.shape_cast %4 : vector<1x32xf32> to vector<32xf32>
    %c0_7 = arith.constant 0 : index
    %c0_8 = arith.constant 0 : index
    %6 = vector.load %arg7[%c0_7, %c0_8] : memref<1x32xf32, #tpu.memory_space<vmem>>, vector<1x32xf32>
    %7 = vector.shape_cast %6 : vector<1x32xf32> to vector<32xf32>
    %cst = arith.constant dense<0.000000e+00> : vector<8xf32>
    %8 = vector.multi_reduction <add>, %1, %cst [1] : vector<8x32xf32> to vector<8xf32>
    %9 = vector.shape_cast %8 : vector<8xf32> to vector<8x1xf32>
    %cst_9 = arith.constant 3.200000e+01 : f32
    %10 = vector.broadcast %cst_9 : f32 to vector<8x1xf32>
    %11 = arith.divf %9, %10 : vector<8x1xf32>
    %12 = vector.broadcast %11 : vector<8x1xf32> to vector<8x32xf32>
    %13 = arith.subf %1, %12 : vector<8x32xf32>
    %14 = arith.mulf %13, %13 : vector<8x32xf32>
    %cst_10 = arith.constant dense<0.000000e+00> : vector<8xf32>
    %15 = vector.multi_reduction <add>, %14, %cst_10 [1] : vector<8x32xf32> to vector<8xf32>
    %16 = vector.shape_cast %15 : vector<8xf32> to vector<8x1xf32>
    %cst_11 = arith.constant 3.200000e+01 : f32
    %17 = vector.broadcast %cst_11 : f32 to vector<8x1xf32>
    %18 = arith.divf %16, %17 : vector<8x1xf32>
    %19 = vector.broadcast %11 : vector<8x1xf32> to vector<8x32xf32>
    %20 = arith.subf %1, %19 : vector<8x32xf32>
    %cst_12 = arith.constant 9.99999974E-6 : f32
    %21 = vector.broadcast %cst_12 : f32 to vector<8x1xf32>
    %22 = arith.addf %18, %21 : vector<8x1xf32>
    %23 = math.rsqrt %22 : vector<8x1xf32>
    %24 = vector.broadcast %23 : vector<8x1xf32> to vector<8x32xf32>
    %25 = arith.mulf %20, %24 : vector<8x32xf32>
    %26 = vector.shape_cast %5 : vector<32xf32> to vector<1x32xf32>
    %27 = vector.broadcast %26 : vector<1x32xf32> to vector<8x32xf32>
    %28 = arith.mulf %25, %27 : vector<8x32xf32>
    %29 = vector.shape_cast %7 : vector<32xf32> to vector<1x32xf32>
    %30 = vector.broadcast %29 : vector<1x32xf32> to vector<8x32xf32>
    %31 = arith.addf %28, %30 : vector<8x32xf32>
    %32 = arith.truncf %31 : vector<8x32xf32> to vector<8x32xbf16>
    %33 = vector.shape_cast %32 : vector<8x32xbf16> to vector<1x8x32xbf16>
    %34 = vector.shape_cast %33 : vector<1x8x32xbf16> to vector<1x8x32xbf16>
    %35 = vector.broadcast %34 : vector<1x8x32xbf16> to vector<4x8x32xbf16>
    %36 = vector.shape_cast %3 : vector<8x32xbf16> to vector<1x8x32xbf16>
    %37 = vector.shape_cast %36 : vector<1x8x32xbf16> to vector<1x8x32xbf16>
    %38 = vector.broadcast %37 : vector<1x8x32xbf16> to vector<4x8x32xbf16>
    %c0_13 = arith.constant 0 : index
    %c0_14 = arith.constant 0 : index
    %c0_15 = arith.constant 0 : index
    %39 = vector.load %arg8[%c0_13, %c0_14, %c0_15] : memref<4x32x8xbf16, #tpu.memory_space<vmem>>, vector<4x32x8xbf16>
    "tpu.trace_start"() <{level = 10 : i32, message = "hnd,hde->hne"}> : () -> ()
    %cst_16 = arith.constant dense<0.000000e+00> : vector<4x8x8xf32>
    %40 = tpu.matmul %35, %39, %cst_16 {dimension_numbers = #tpu.dot_dimension_numbers<[2], [1], [1], [2], [0, 0, 0, 1, 1, 2], [0], [0]>} : vector<4x8x32xbf16>, vector<4x32x8xbf16>, vector<4x8x8xf32> -> vector<4x8x8xf32>
    "tpu.trace_stop"() : () -> ()
    %c0_17 = arith.constant 0 : index
    %c0_18 = arith.constant 0 : index
    %c0_19 = arith.constant 0 : index
    %41 = vector.load %arg9[%c0_17, %c0_18, %c0_19] : memref<4x32x8xbf16, #tpu.memory_space<vmem>>, vector<4x32x8xbf16>
    "tpu.trace_start"() <{level = 10 : i32, message = "hmd,hde->hme"}> : () -> ()
    %cst_20 = arith.constant dense<0.000000e+00> : vector<4x8x8xf32>
    %42 = tpu.matmul %38, %41, %cst_20 {dimension_numbers = #tpu.dot_dimension_numbers<[2], [1], [1], [2], [0, 0, 0, 1, 1, 2], [0], [0]>} : vector<4x8x32xbf16>, vector<4x32x8xbf16>, vector<4x8x8xf32> -> vector<4x8x8xf32>
    "tpu.trace_stop"() : () -> ()
    %c0_21 = arith.constant 0 : index
    %c0_22 = arith.constant 0 : index
    %c0_23 = arith.constant 0 : index
    %43 = vector.load %arg10[%c0_21, %c0_22, %c0_23] : memref<4x32x8xbf16, #tpu.memory_space<vmem>>, vector<4x32x8xbf16>
    "tpu.trace_start"() <{level = 10 : i32, message = "hmd,hde->hme"}> : () -> ()
    %cst_24 = arith.constant dense<0.000000e+00> : vector<4x8x8xf32>
    %44 = tpu.matmul %38, %43, %cst_24 {dimension_numbers = #tpu.dot_dimension_numbers<[2], [1], [1], [2], [0, 0, 0, 1, 1, 2], [0], [0]>} : vector<4x8x32xbf16>, vector<4x32x8xbf16>, vector<4x8x8xf32> -> vector<4x8x8xf32>
    "tpu.trace_stop"() : () -> ()
    %45 = arith.truncf %40 : vector<4x8x8xf32> to vector<4x8x8xbf16>
    %46 = arith.truncf %42 : vector<4x8x8xf32> to vector<4x8x8xbf16>
    "tpu.trace_start"() <{level = 10 : i32, message = "hne,hme->hnm"}> : () -> ()
    %cst_25 = arith.constant dense<0.000000e+00> : vector<4x8x8xf32>
    %47 = tpu.matmul %45, %46, %cst_25 {dimension_numbers = #tpu.dot_dimension_numbers<[2], [2], [1], [1], [0, 0, 0, 1, 1, 1], [0], [0]>} : vector<4x8x8xbf16>, vector<4x8x8xbf16>, vector<4x8x8xf32> -> vector<4x8x8xf32>
    "tpu.trace_stop"() : () -> ()
    %c0_26 = arith.constant 0 : index
    %c0_27 = arith.constant 0 : index
    %c0_28 = arith.constant 0 : index
    %48 = vector.load %arg4[%c0_26, %c0_27, %c0_28] : memref<1x8x1xi32, #tpu.memory_space<vmem>>, vector<1x8x1xi32>
    %49 = vector.shape_cast %48 : vector<1x8x1xi32> to vector<8x1xi32>
    %c0_29 = arith.constant 0 : index
    %c0_30 = arith.constant 0 : index
    %c0_31 = arith.constant 0 : index
    %50 = vector.load %arg5[%c0_29, %c0_30, %c0_31] : memref<1x1x8xi32, #tpu.memory_space<vmem>>, vector<1x1x8xi32>
    %51 = vector.shape_cast %50 : vector<1x1x8xi32> to vector<1x8xi32>
    %52 = vector.broadcast %49 : vector<8x1xi32> to vector<8x8xi32>
    %53 = vector.broadcast %51 : vector<1x8xi32> to vector<8x8xi32>
    %54 = arith.cmpi sge, %52, %53 : vector<8x8xi32>
    %55 = vector.shape_cast %54 : vector<8x8xi1> to vector<1x8x8xi1>
    %cst_32 = arith.constant -3.40282347E+38 : f32
    %56 = vector.shape_cast %55 : vector<1x8x8xi1> to vector<1x8x8xi1>
    %57 = vector.broadcast %56 : vector<1x8x8xi1> to vector<4x8x8xi1>
    %58 = vector.broadcast %cst_32 : f32 to vector<4x8x8xf32>
    %59 = arith.select %57, %47, %58 : vector<4x8x8xi1>, vector<4x8x8xf32>
    %cst_33 = arith.constant dense<0xFF800000> : vector<4x8xf32>
    %60 = vector.multi_reduction <maximumf>, %59, %cst_33 [2] : vector<4x8x8xf32> to vector<4x8xf32>
    %61 = vector.shape_cast %60 : vector<4x8xf32> to vector<4x8x1xf32>
    %62 = vector.broadcast %61 : vector<4x8x1xf32> to vector<4x8x8xf32>
    %63 = arith.subf %59, %62 : vector<4x8x8xf32>
    %64 = math.exp %63 : vector<4x8x8xf32>
    %cst_34 = arith.constant dense<0.000000e+00> : vector<4x8xf32>
    %65 = vector.multi_reduction <add>, %64, %cst_34 [2] : vector<4x8x8xf32> to vector<4x8xf32>
    %66 = vector.shape_cast %65 : vector<4x8xf32> to vector<4x8x1xf32>
    %67 = tpu.reciprocal %66 {approx = true} : vector<4x8x1xf32> -> vector<4x8x1xf32>
    %68 = vector.broadcast %67 : vector<4x8x1xf32> to vector<4x8x8xf32>
    %69 = arith.mulf %64, %68 : vector<4x8x8xf32>
    %70 = arith.truncf %69 : vector<4x8x8xf32> to vector<4x8x8xbf16>
    %71 = arith.truncf %44 : vector<4x8x8xf32> to vector<4x8x8xbf16>
    "tpu.trace_start"() <{level = 10 : i32, message = "hnm,hme->hne"}> : () -> ()
    %cst_35 = arith.constant dense<0.000000e+00> : vector<4x8x8xf32>
    %72 = tpu.matmul %70, %71, %cst_35 {dimension_numbers = #tpu.dot_dimension_numbers<[2], [1], [1], [2], [0, 0, 0, 1, 1, 2], [0], [0]>} : vector<4x8x8xbf16>, vector<4x8x8xbf16>, vector<4x8x8xf32> -> vector<4x8x8xf32>
    "tpu.trace_stop"() : () -> ()
    %73 = arith.truncf %72 : vector<4x8x8xf32> to vector<4x8x8xbf16>
    %c0_36 = arith.constant 0 : index
    %c0_37 = arith.constant 0 : index
    %c0_38 = arith.constant 0 : index
    %74 = vector.load %arg11[%c0_36, %c0_37, %c0_38] : memref<4x8x32xbf16, #tpu.memory_space<vmem>>, vector<4x8x32xbf16>
    "tpu.trace_start"() <{level = 10 : i32, message = "hne,hec->hnc"}> : () -> ()
    %cst_39 = arith.constant dense<0.000000e+00> : vector<4x8x32xf32>
    %75 = tpu.matmul %73, %74, %cst_39 {dimension_numbers = #tpu.dot_dimension_numbers<[2], [1], [1], [2], [0, 0, 0, 1, 1, 2], [0], [0]>} : vector<4x8x8xbf16>, vector<4x8x32xbf16>, vector<4x8x32xf32> -> vector<4x8x32xf32>
    "tpu.trace_stop"() : () -> ()
    %cst_40 = arith.constant dense<0.000000e+00> : vector<8x32xf32>
    %76 = vector.multi_reduction <add>, %75, %cst_40 [0] : vector<4x8x32xf32> to vector<8x32xf32>
    %77 = arith.addf %76, %1 : vector<8x32xf32>
    %c0_41 = arith.constant 0 : index
    %c0_42 = arith.constant 0 : index
    %78 = vector.load %arg12[%c0_41, %c0_42] : memref<1x32xf32, #tpu.memory_space<vmem>>, vector<1x32xf32>
    %79 = vector.shape_cast %78 : vector<1x32xf32> to vector<32xf32>
    %c0_43 = arith.constant 0 : index
    %c0_44 = arith.constant 0 : index
    %80 = vector.load %arg13[%c0_43, %c0_44] : memref<1x32xf32, #tpu.memory_space<vmem>>, vector<1x32xf32>
    %81 = vector.shape_cast %80 : vector<1x32xf32> to vector<32xf32>
    %cst_45 = arith.constant dense<0.000000e+00> : vector<8xf32>
    %82 = vector.multi_reduction <add>, %77, %cst_45 [1] : vector<8x32xf32> to vector<8xf32>
    %83 = vector.shape_cast %82 : vector<8xf32> to vector<8x1xf32>
    %cst_46 = arith.constant 3.200000e+01 : f32
    %84 = vector.broadcast %cst_46 : f32 to vector<8x1xf32>
    %85 = arith.divf %83, %84 : vector<8x1xf32>
    %86 = vector.broadcast %85 : vector<8x1xf32> to vector<8x32xf32>
    %87 = arith.subf %77, %86 : vector<8x32xf32>
    %88 = arith.mulf %87, %87 : vector<8x32xf32>
    %cst_47 = arith.constant dense<0.000000e+00> : vector<8xf32>
    %89 = vector.multi_reduction <add>, %88, %cst_47 [1] : vector<8x32xf32> to vector<8xf32>
    %90 = vector.shape_cast %89 : vector<8xf32> to vector<8x1xf32>
    %cst_48 = arith.constant 3.200000e+01 : f32
    %91 = vector.broadcast %cst_48 : f32 to vector<8x1xf32>
    %92 = arith.divf %90, %91 : vector<8x1xf32>
    %93 = vector.broadcast %85 : vector<8x1xf32> to vector<8x32xf32>
    %94 = arith.subf %77, %93 : vector<8x32xf32>
    %cst_49 = arith.constant 9.99999974E-6 : f32
    %95 = vector.broadcast %cst_49 : f32 to vector<8x1xf32>
    %96 = arith.addf %92, %95 : vector<8x1xf32>
    %97 = math.rsqrt %96 : vector<8x1xf32>
    %98 = vector.broadcast %97 : vector<8x1xf32> to vector<8x32xf32>
    %99 = arith.mulf %94, %98 : vector<8x32xf32>
    %100 = vector.shape_cast %79 : vector<32xf32> to vector<1x32xf32>
    %101 = vector.broadcast %100 : vector<1x32xf32> to vector<8x32xf32>
    %102 = arith.mulf %99, %101 : vector<8x32xf32>
    %103 = vector.shape_cast %81 : vector<32xf32> to vector<1x32xf32>
    %104 = vector.broadcast %103 : vector<1x32xf32> to vector<8x32xf32>
    %105 = arith.addf %102, %104 : vector<8x32xf32>
    %106 = arith.truncf %105 : vector<8x32xf32> to vector<8x32xbf16>
    %c0_50 = arith.constant 0 : index
    %c0_51 = arith.constant 0 : index
    %107 = vector.load %arg14[%c0_50, %c0_51] : memref<32x128xbf16, #tpu.memory_space<vmem>>, vector<32x128xbf16>
    %cst_52 = arith.constant dense<0.000000e+00> : vector<8x128xf32>
    %108 = tpu.matmul %106, %107, %cst_52 {dimension_numbers = #tpu.dot_dimension_numbers<[1], [0], [0], [1], [0, 0, 1, 1], [], []>} : vector<8x32xbf16>, vector<32x128xbf16>, vector<8x128xf32> -> vector<8x128xf32>
    %cst_53 = arith.constant 5.000000e-01 : f32
    %109 = vector.broadcast %cst_53 : f32 to vector<8x128xf32>
    %110 = arith.mulf %109, %108 : vector<8x128xf32>
    %cst_54 = arith.constant 0.707106769 : f32
    %111 = vector.broadcast %cst_54 : f32 to vector<8x128xf32>
    %112 = arith.mulf %108, %111 : vector<8x128xf32>
    %113 = math.erf %112 : vector<8x128xf32>
    %cst_55 = arith.constant 1.000000e+00 : f32
    %114 = vector.broadcast %cst_55 : f32 to vector<8x128xf32>
    %115 = arith.addf %114, %113 : vector<8x128xf32>
    %116 = arith.mulf %110, %115 : vector<8x128xf32>
    %117 = arith.truncf %116 : vector<8x128xf32> to vector<8x128xbf16>
    %c0_56 = arith.constant 0 : index
    %c0_57 = arith.constant 0 : index
    %118 = vector.load %arg15[%c0_56, %c0_57] : memref<128x32xbf16, #tpu.memory_space<vmem>>, vector<128x32xbf16>
    %cst_58 = arith.constant dense<0.000000e+00> : vector<8x32xf32>
    %119 = tpu.matmul %117, %118, %cst_58 {dimension_numbers = #tpu.dot_dimension_numbers<[1], [0], [0], [1], [0, 0, 1, 1], [], []>} : vector<8x128xbf16>, vector<128x32xbf16>, vector<8x32xf32> -> vector<8x32xf32>
    %120 = arith.addf %119, %77 : vector<8x32xf32>
    %c0_59 = arith.constant 0 : index
    %c0_60 = arith.constant 0 : index
    %c0_61 = arith.constant 0 : index
    %121 = vector.load %arg16[%c0_59, %c0_60, %c0_61] : memref<1x8x32xf32, #tpu.memory_space<vmem>>, vector<1x8x32xf32>
    %122 = vector.shape_cast %121 : vector<1x8x32xf32> to vector<8x32xf32>
    %123 = vector.shape_cast %120 : vector<8x32xf32> to vector<1x8x32xf32>
    tpu.vector_store %arg16[%c0_59, %c0_60, %c0_61], %123 {strides = array<i32>} : memref<1x8x32xf32, #tpu.memory_space<vmem>>, vector<1x8x32xf32>,
    return
  }
  func.func @transform_0(%arg0: i32, %arg1: i32) -> (i32, i32, i32) {
    %c0_i32 = arith.constant 0 : i32
    %c0_i32_0 = arith.constant 0 : i32
    return %arg0, %arg1, %c0_i32 : i32, i32, i32
  }
  func.func @transform_1(%arg0: i32, %arg1: i32) -> (i32, i32, i32) {
    %c0_i32 = arith.constant 0 : i32
    %c0_i32_0 = arith.constant 0 : i32
    %c0_i32_1 = arith.constant 0 : i32
    return %arg0, %c0_i32, %c0_i32_0 : i32, i32, i32
  }
  func.func @transform_2(%arg0: i32, %arg1: i32) -> (i32, i32, i32) {
    %c0_i32 = arith.constant 0 : i32
    %c0_i32_0 = arith.constant 0 : i32
    return %arg0, %arg1, %c0_i32 : i32, i32, i32
  }
  func.func @transform_3(%arg0: i32, %arg1: i32) -> (i32, i32, i32) {
    %c0_i32 = arith.constant 0 : i32
    %c0_i32_0 = arith.constant 0 : i32
    %c0_i32_1 = arith.constant 0 : i32
    return %arg0, %c0_i32, %c0_i32_0 : i32, i32, i32
  }
  func.func @transform_4(%arg0: i32, %arg1: i32) -> (i32, i32) {
    %c0_i32 = arith.constant 0 : i32
    %c0_i32_0 = arith.constant 0 : i32
    %c0_i32_1 = arith.constant 0 : i32
    return %c0_i32, %c0_i32_0 : i32, i32
  }
  func.func @transform_5(%arg0: i32, %arg1: i32) -> (i32, i32) {
    %c0_i32 = arith.constant 0 : i32
    %c0_i32_0 = arith.constant 0 : i32
    %c0_i32_1 = arith.constant 0 : i32
    return %c0_i32, %c0_i32_0 : i32, i32
  }
  func.func @transform_6(%arg0: i32, %arg1: i32) -> (i32, i32, i32) {
    %c0_i32 = arith.constant 0 : i32
    %c0_i32_0 = arith.constant 0 : i32
    %c0_i32_1 = arith.constant 0 : i32
    %c0_i32_2 = arith.constant 0 : i32
    return %c0_i32, %c0_i32_0, %c0_i32_1 : i32, i32, i32
  }
  func.func @transform_7(%arg0: i32, %arg1: i32) -> (i32, i32, i32) {
    %c0_i32 = arith.constant 0 : i32
    %c0_i32_0 = arith.constant 0 : i32
    %c0_i32_1 = arith.constant 0 : i32
    %c0_i32_2 = arith.constant 0 : i32
    return %c0_i32, %c0_i32_0, %c0_i32_1 : i32, i32, i32
  }
  func.func @transform_8(%arg0: i32, %arg1: i32) -> (i32, i32, i32) {
    %c0_i32 = arith.constant 0 : i32
    %c0_i32_0 = arith.constant 0 : i32
    %c0_i32_1 = arith.constant 0 : i32
    %c0_i32_2 = arith.constant 0 : i32
    return %c0_i32, %c0_i32_0, %c0_i32_1 : i32, i32, i32
  }
  func.func @transform_9(%arg0: i32, %arg1: i32) -> (i32, i32, i32) {
    %c0_i32 = arith.constant 0 : i32
    %c0_i32_0 = arith.constant 0 : i32
    %c0_i32_1 = arith.constant 0 : i32
    %c0_i32_2 = arith.constant 0 : i32
    return %c0_i32, %c0_i32_0, %c0_i32_1 : i32, i32, i32
  }
  func.func @transform_10(%arg0: i32, %arg1: i32) -> (i32, i32) {
    %c0_i32 = arith.constant 0 : i32
    %c0_i32_0 = arith.constant 0 : i32
    %c0_i32_1 = arith.constant 0 : i32
    return %c0_i32, %c0_i32_0 : i32, i32
  }
  func.func @transform_11(%arg0: i32, %arg1: i32) -> (i32, i32) {
    %c0_i32 = arith.constant 0 : i32
    %c0_i32_0 = arith.constant 0 : i32
    %c0_i32_1 = arith.constant 0 : i32
    return %c0_i32, %c0_i32_0 : i32, i32
  }
  func.func @transform_12(%arg0: i32, %arg1: i32) -> (i32, i32) {
    %c0_i32 = arith.constant 0 : i32
    %c0_i32_0 = arith.constant 0 : i32
    %c0_i32_1 = arith.constant 0 : i32
    return %c0_i32, %c0_i32_0 : i32, i32
  }
  func.func @transform_13(%arg0: i32, %arg1: i32) -> (i32, i32) {
    %c0_i32 = arith.constant 0 : i32
    %c0_i32_0 = arith.constant 0 : i32
    %c0_i32_1 = arith.constant 0 : i32
    return %c0_i32, %c0_i32_0 : i32, i32
  }
  func.func @transform_14(%arg0: i32, %arg1: i32) -> (i32, i32, i32) {
    %c0_i32 = arith.constant 0 : i32
    %c0_i32_0 = arith.constant 0 : i32
    return %arg0, %arg1, %c0_i32 : i32, i32, i32
  }
}

</mosaic_0001>

<llo_original>
// kernel: tpu_custom_call.1
$region0: #{tpu_custom_call.1}
  #allocation0 [shape = 'u32[]', space=smem, size = 0x4, offset = 0x4, fixed_abs, tag = 'smem constant byte address 0x4 - core index']
  #allocation1 [shape = 'u32[72,128]{1,0:T(1,128)}', space=vmem, size = 0x9000, scoped, tag = 'internal scratch']
  %s0 = inlined_call_operand.vmem [shape: f32[2,8,32], index: 0, kind: input, shape index: {}]
  %s1 = inlined_call_operand.vmem [shape: bf16[2,8,32], index: 1, kind: input, shape index: {}]
  %s2 = inlined_call_operand.vmem [shape: s32[2,8,1], index: 2, kind: input, shape index: {}]
  %s3 = inlined_call_operand.vmem [shape: s32[2,1,8], index: 3, kind: input, shape index: {}]
  %s4 = inlined_call_operand.vmem [shape: f32[1,32], index: 4, kind: input, shape index: {}]
  %s5 = inlined_call_operand.vmem [shape: f32[1,32], index: 5, kind: input, shape index: {}]
  %s6 = inlined_call_operand.vmem [shape: bf16[4,32,8], index: 6, kind: input, shape index: {}]
  %s7 = inlined_call_operand.vmem [shape: bf16[4,32,8], index: 7, kind: input, shape index: {}]
  %s8 = inlined_call_operand.vmem [shape: bf16[4,32,8], index: 8, kind: input, shape index: {}]
  %s9 = inlined_call_operand.vmem [shape: bf16[4,8,32], index: 9, kind: input, shape index: {}]
  %s10 = inlined_call_operand.vmem [shape: f32[1,32], index: 10, kind: input, shape index: {}]
  %s11 = inlined_call_operand.vmem [shape: f32[1,32], index: 11, kind: input, shape index: {}]
  %s12 = inlined_call_operand.vmem [shape: bf16[32,128], index: 12, kind: input, shape index: {}]
  %s13 = inlined_call_operand.vmem [shape: bf16[128,32], index: 13, kind: input, shape index: {}]
  %s14 = inlined_call_operand.hbm [shape: f32[2,8,32], index: 14, kind: output, shape index: {}]
  %s15 = sld [smem:[#allocation0]]
  $region89: #{tpu_custom_call.1} parent=0
    _
  %s17 = ssub.s32 1, %s15
  %s18 = scalar_select 0, %s17, %s15
  $region1: #{tpu_custom_call.1} parent=0
    #allocation2 [shape = 'u8[8192]{0}', space=vmem, size = 0x2000, scoped, tag = 'output window, operand 0']
    #allocation3 [shape = 's32[2]{0}', space=sflag, size = 0x8, scoped, tag = 'scoped memory for tpu_custom_call.1']
    %19 = vsyncpa [#allocation3], 0
    %s20 = scalar_lea.sflag [#allocation3], 1
    %21 = vsyncpa %s20, 0
    loop: start=0, step=1, limit=4
    $region2: #{tpu_custom_call.1} parent=1 // loop_pre_header
      _
    $region3: #{tpu_custom_call.1} parent=1 // loop_header
      %s23 = sphi 0, %s27
      %p24 = scmp.ge.s32.totalorder %s23, 4
      %s30 = sphi 0, %s42
      %s31 = sphi 0, %s38
      %s32 = sphi 0, %s30
      %s33 = sphi 0, %s31
      %s34 = sphi 0, %s32
      %s35 = sphi 0, %s33
      %s47 = sphi 0, %s49
      %s50 = sphi 0, %s47
      %s51 = sphi 0, %s50
      %s67 = sphi 0, %s51
      %s73 = sphi 0, %s75
      %s76 = sphi 0, %s73
      %s77 = sphi 0, %s76
      %s93 = sphi 0, %s77
      %s101 = sphi 0, %s103
      %s104 = sphi 0, %s101
      %s105 = sphi 0, %s104
      %s121 = sphi 0, %s105
      %s127 = sphi 0, %s129
      %s130 = sphi 0, %s127
      %s131 = sphi 0, %s130
      %s147 = sphi 0, %s131
      %s151 = sphi 0, %s151
      %s153 = sphi 0, %s151
      %s154 = sphi 0, %s153
      %s168 = sphi 0, %s154
      %s172 = sphi 0, %s172
      %s174 = sphi 0, %s172
      %s175 = sphi 0, %s174
      %s189 = sphi 0, %s175
      %s193 = sphi 0, %s193
      %s195 = sphi 0, %s193
      %s196 = sphi 0, %s195
      %s210 = sphi 0, %s196
      %s214 = sphi 0, %s214
      %s216 = sphi 0, %s214
      %s217 = sphi 0, %s216
      %s231 = sphi 0, %s217
      %s235 = sphi 0, %s235
      %s237 = sphi 0, %s235
      %s238 = sphi 0, %s237
      %s252 = sphi 0, %s238
      %s256 = sphi 0, %s256
      %s258 = sphi 0, %s256
      %s259 = sphi 0, %s258
      %s273 = sphi 0, %s259
      %s277 = sphi 0, %s277
      %s279 = sphi 0, %s277
      %s280 = sphi 0, %s279
      %s294 = sphi 0, %s280
      %s298 = sphi 0, %s298
      %s300 = sphi 0, %s298
      %s301 = sphi 0, %s300
      %s315 = sphi 0, %s301
      %s319 = sphi 0, %s319
      %s321 = sphi 0, %s319
      %s322 = sphi 0, %s321
      %s336 = sphi 0, %s322
      %s340 = sphi 0, %s340
      %s342 = sphi 0, %s340
      %s343 = sphi 0, %s342
      %s357 = sphi 0, %s343
      %s365 = sphi 0, %s367
      %s368 = sphi 0, %s365
      %s369 = sphi 0, %s368
      %s385 = sphi 0, %s369
    $region4: #{tpu_custom_call.1} parent=1 // loop_header_branch
      %26 = sbr.rel (%p24) target = $region8
    $region5: #{tpu_custom_call.1} parent=1 // loop_body
      %s28 = ssub.s32 %s23, 1
      %s29 = ssub.s32 %s23, 2
      %s36 = sadd.s32 1, %s31
      %p37 = scmp.ge.s32.totalorder %s36, 1
      %s38 = scalar_select %p37, 0, %s36
      %s39 = sadd.s32 1, %s30
      %s40 = scalar_select %p37, %s39, %s30
      %p41 = scmp.ge.s32.totalorder %s40, 2
      %s42 = scalar_select %p41, 0, %s40
      %s43 = ssub.s32 %s30, %s42
      %s44 = ssub.s32 %s31, %s38
      %s45 = sor.u32 %s43, %s44
      %p46 = scmp.eq.s32.totalorder %s45, 0
      %s48 = sadd.s32 %s47, 1
      %s49 = scalar_select %p46, %s47, %s48
      %p52 = pneg %p46
      %p53 = scmp.eq.s32.totalorder %s23, 1
      %p54 = por %p52, %p53
      %p55 = scmp.ne.s32.totalorder %s47, %s50
      %p56 = scmp.eq.s32.totalorder %s23, 0
      %p57 = por %p55, %p56
      %p58 = scmp.ne.s32.totalorder %s47, %s50
      %p59 = scmp.eq.s32.totalorder %s28, 1
      %p60 = por %p58, %p59
      %p61 = scmp.ne.s32.totalorder %s50, %s51
      %p62 = scmp.eq.s32.totalorder %s28, 0
      %p63 = por %p61, %p62
      %p64 = scmp.ne.s32.totalorder %s50, %s51
      %p65 = scmp.eq.s32.totalorder %s29, 1
      %p66 = por %p64, %p65
      %p68 = scmp.ne.s32.totalorder %s51, %s67
      %p69 = scmp.eq.s32.totalorder %s29, 0
      %p70 = por %p68, %p69
      %s71 = ssub.s32 %s30, %s42
      %p72 = scmp.eq.s32.totalorder %s71, 0
      %s74 = sadd.s32 %s73, 1
      %s75 = scalar_select %p72, %s73, %s74
      %p78 = pneg %p72
      %p79 = scmp.eq.s32.totalorder %s23, 1
      %p80 = por %p78, %p79
      %p81 = scmp.ne.s32.totalorder %s73, %s76
      %p82 = scmp.eq.s32.totalorder %s23, 0
      %p83 = por %p81, %p82
      %p84 = scmp.ne.s32.totalorder %s73, %s76
      %p85 = scmp.eq.s32.totalorder %s28, 1
      %p86 = por %p84, %p85
      %p87 = scmp.ne.s32.totalorder %s76, %s77
      %p88 = scmp.eq.s32.totalorder %s28, 0
      %p89 = por %p87, %p88
      %p90 = scmp.ne.s32.totalorder %s76, %s77
      %p91 = scmp.eq.s32.totalorder %s29, 1
      %p92 = por %p90, %p91
      %p94 = scmp.ne.s32.totalorder %s77, %s93
      %p95 = scmp.eq.s32.totalorder %s29, 0
      %p96 = por %p94, %p95
      %s97 = ssub.s32 %s30, %s42
      %s98 = ssub.s32 %s31, %s38
      %s99 = sor.u32 %s97, %s98
      %p100 = scmp.eq.s32.totalorder %s99, 0
      %s102 = sadd.s32 %s101, 1
      %s103 = scalar_select %p100, %s101, %s102
      %p106 = pneg %p100
      %p107 = scmp.eq.s32.totalorder %s23, 1
      %p108 = por %p106, %p107
      %p109 = scmp.ne.s32.totalorder %s101, %s104
      %p110 = scmp.eq.s32.totalorder %s23, 0
      %p111 = por %p109, %p110
      %p112 = scmp.ne.s32.totalorder %s101, %s104
      %p113 = scmp.eq.s32.totalorder %s28, 1
      %p114 = por %p112, %p113
      %p115 = scmp.ne.s32.totalorder %s104, %s105
      %p116 = scmp.eq.s32.totalorder %s28, 0
      %p117 = por %p115, %p116
      %p118 = scmp.ne.s32.totalorder %s104, %s105
      %p119 = scmp.eq.s32.totalorder %s29, 1
      %p120 = por %p118, %p119
      %p122 = scmp.ne.s32.totalorder %s105, %s121
      %p123 = scmp.eq.s32.totalorder %s29, 0
      %p124 = por %p122, %p123
      %s125 = ssub.s32 %s30, %s42
      %p126 = scmp.eq.s32.totalorder %s125, 0
      %s128 = sadd.s32 %s127, 1
      %s129 = scalar_select %p126, %s127, %s128
      %p132 = pneg %p126
      %p133 = scmp.eq.s32.totalorder %s23, 1
      %p134 = por %p132, %p133
      %p135 = scmp.ne.s32.totalorder %s127, %s130
      %p136 = scmp.eq.s32.totalorder %s23, 0
      %p137 = por %p135, %p136
      %p138 = scmp.ne.s32.totalorder %s127, %s130
      %p139 = scmp.eq.s32.totalorder %s28, 1
      %p140 = por %p138, %p139
      %p141 = scmp.ne.s32.totalorder %s130, %s131
      %p142 = scmp.eq.s32.totalorder %s28, 0
      %p143 = por %p141, %p142
      %p144 = scmp.ne.s32.totalorder %s130, %s131
      %p145 = scmp.eq.s32.totalorder %s29, 1
      %p146 = por %p144, %p145
      %p148 = scmp.ne.s32.totalorder %s131, %s147
      %p149 = scmp.eq.s32.totalorder %s29, 0
      %p150 = por %p148, %p149
      %s152 = sadd.s32 %s151, 1
      %p155 = scmp.eq.s32.totalorder %s23, 1
      %p156 = scmp.ne.s32.totalorder %s151, %s153
      %p157 = scmp.eq.s32.totalorder %s23, 0
      %p158 = por %p156, %p157
      %p159 = scmp.ne.s32.totalorder %s151, %s153
      %p160 = scmp.eq.s32.totalorder %s28, 1
      %p161 = por %p159, %p160
      %p162 = scmp.ne.s32.totalorder %s153, %s154
      %p163 = scmp.eq.s32.totalorder %s28, 0
      %p164 = por %p162, %p163
      %p165 = scmp.ne.s32.totalorder %s153, %s154
      %p166 = scmp.eq.s32.totalorder %s29, 1
      %p167 = por %p165, %p166
      %p169 = scmp.ne.s32.totalorder %s154, %s168
      %p170 = scmp.eq.s32.totalorder %s29, 0
      %p171 = por %p169, %p170
      %s173 = sadd.s32 %s172, 1
      %p176 = scmp.eq.s32.totalorder %s23, 1
      %p177 = scmp.ne.s32.totalorder %s172, %s174
      %p178 = scmp.eq.s32.totalorder %s23, 0
      %p179 = por %p177, %p178
      %p180 = scmp.ne.s32.totalorder %s172, %s174
      %p181 = scmp.eq.s32.totalorder %s28, 1
      %p182 = por %p180, %p181
      %p183 = scmp.ne.s32.totalorder %s174, %s175
      %p184 = scmp.eq.s32.totalorder %s28, 0
      %p185 = por %p183, %p184
      %p186 = scmp.ne.s32.totalorder %s174, %s175
      %p187 = scmp.eq.s32.totalorder %s29, 1
      %p188 = por %p186, %p187
      %p190 = scmp.ne.s32.totalorder %s175, %s189
      %p191 = scmp.eq.s32.totalorder %s29, 0
      %p192 = por %p190, %p191
      %s194 = sadd.s32 %s193, 1
      %p197 = scmp.eq.s32.totalorder %s23, 1
      %p198 = scmp.ne.s32.totalorder %s193, %s195
      %p199 = scmp.eq.s32.totalorder %s23, 0
      %p200 = por %p198, %p199
      %p201 = scmp.ne.s32.totalorder %s193, %s195
      %p202 = scmp.eq.s32.totalorder %s28, 1
      %p203 = por %p201, %p202
      %p204 = scmp.ne.s32.totalorder %s195, %s196
      %p205 = scmp.eq.s32.totalorder %s28, 0
      %p206 = por %p204, %p205
      %p207 = scmp.ne.s32.totalorder %s195, %s196
      %p208 = scmp.eq.s32.totalorder %s29, 1
      %p209 = por %p207, %p208
      %p211 = scmp.ne.s32.totalorder %s196, %s210
      %p212 = scmp.eq.s32.totalorder %s29, 0
      %p213 = por %p211, %p212
      %s215 = sadd.s32 %s214, 1
      %p218 = scmp.eq.s32.totalorder %s23, 1
      %p219 = scmp.ne.s32.totalorder %s214, %s216
      %p220 = scmp.eq.s32.totalorder %s23, 0
      %p221 = por %p219, %p220
      %p222 = scmp.ne.s32.totalorder %s214, %s216
      %p223 = scmp.eq.s32.totalorder %s28, 1
      %p224 = por %p222, %p223
      %p225 = scmp.ne.s32.totalorder %s216, %s217
      %p226 = scmp.eq.s32.totalorder %s28, 0
      %p227 = por %p225, %p226
      %p228 = scmp.ne.s32.totalorder %s216, %s217
      %p229 = scmp.eq.s32.totalorder %s29, 1
      %p230 = por %p228, %p229
      %p232 = scmp.ne.s32.totalorder %s217, %s231
      %p233 = scmp.eq.s32.totalorder %s29, 0
      %p234 = por %p232, %p233
      %s236 = sadd.s32 %s235, 1
      %p239 = scmp.eq.s32.totalorder %s23, 1
      %p240 = scmp.ne.s32.totalorder %s235, %s237
      %p241 = scmp.eq.s32.totalorder %s23, 0
      %p242 = por %p240, %p241
      %p243 = scmp.ne.s32.totalorder %s235, %s237
      %p244 = scmp.eq.s32.totalorder %s28, 1
      %p245 = por %p243, %p244
      %p246 = scmp.ne.s32.totalorder %s237, %s238
      %p247 = scmp.eq.s32.totalorder %s28, 0
      %p248 = por %p246, %p247
      %p249 = scmp.ne.s32.totalorder %s237, %s238
      %p250 = scmp.eq.s32.totalorder %s29, 1
      %p251 = por %p249, %p250
      %p253 = scmp.ne.s32.totalorder %s238, %s252
      %p254 = scmp.eq.s32.totalorder %s29, 0
      %p255 = por %p253, %p254
      %s257 = sadd.s32 %s256, 1
      %p260 = scmp.eq.s32.totalorder %s23, 1
      %p261 = scmp.ne.s32.totalorder %s256, %s258
      %p262 = scmp.eq.s32.totalorder %s23, 0
      %p263 = por %p261, %p262
      %p264 = scmp.ne.s32.totalorder %s256, %s258
      %p265 = scmp.eq.s32.totalorder %s28, 1
      %p266 = por %p264, %p265
      %p267 = scmp.ne.s32.totalorder %s258, %s259
      %p268 = scmp.eq.s32.totalorder %s28, 0
      %p269 = por %p267, %p268
      %p270 = scmp.ne.s32.totalorder %s258, %s259
      %p271 = scmp.eq.s32.totalorder %s29, 1
      %p272 = por %p270, %p271
      %p274 = scmp.ne.s32.totalorder %s259, %s273
      %p275 = scmp.eq.s32.totalorder %s29, 0
      %p276 = por %p274, %p275
      %s278 = sadd.s32 %s277, 1
      %p281 = scmp.eq.s32.totalorder %s23, 1
      %p282 = scmp.ne.s32.totalorder %s277, %s279
      %p283 = scmp.eq.s32.totalorder %s23, 0
      %p284 = por %p282, %p283
      %p285 = scmp.ne.s32.totalorder %s277, %s279
      %p286 = scmp.eq.s32.totalorder %s28, 1
      %p287 = por %p285, %p286
      %p288 = scmp.ne.s32.totalorder %s279, %s280
      %p289 = scmp.eq.s32.totalorder %s28, 0
      %p290 = por %p288, %p289
      %p291 = scmp.ne.s32.totalorder %s279, %s280
      %p292 = scmp.eq.s32.totalorder %s29, 1
      %p293 = por %p291, %p292
      %p295 = scmp.ne.s32.totalorder %s280, %s294
      %p296 = scmp.eq.s32.totalorder %s29, 0
      %p297 = por %p295, %p296
      %s299 = sadd.s32 %s298, 1
      %p302 = scmp.eq.s32.totalorder %s23, 1
      %p303 = scmp.ne.s32.totalorder %s298, %s300
      %p304 = scmp.eq.s32.totalorder %s23, 0
      %p305 = por %p303, %p304
      %p306 = scmp.ne.s32.totalorder %s298, %s300
      %p307 = scmp.eq.s32.totalorder %s28, 1
      %p308 = por %p306, %p307
      %p309 = scmp.ne.s32.totalorder %s300, %s301
      %p310 = scmp.eq.s32.totalorder %s28, 0
      %p311 = por %p309, %p310
      %p312 = scmp.ne.s32.totalorder %s300, %s301
      %p313 = scmp.eq.s32.totalorder %s29, 1
      %p314 = por %p312, %p313
      %p316 = scmp.ne.s32.totalorder %s301, %s315
      %p317 = scmp.eq.s32.totalorder %s29, 0
      %p318 = por %p316, %p317
      %s320 = sadd.s32 %s319, 1
      %p323 = scmp.eq.s32.totalorder %s23, 1
      %p324 = scmp.ne.s32.totalorder %s319, %s321
      %p325 = scmp.eq.s32.totalorder %s23, 0
      %p326 = por %p324, %p325
      %p327 = scmp.ne.s32.totalorder %s319, %s321
      %p328 = scmp.eq.s32.totalorder %s28, 1
      %p329 = por %p327, %p328
      %p330 = scmp.ne.s32.totalorder %s321, %s322
      %p331 = scmp.eq.s32.totalorder %s28, 0
      %p332 = por %p330, %p331
      %p333 = scmp.ne.s32.totalorder %s321, %s322
      %p334 = scmp.eq.s32.totalorder %s29, 1
      %p335 = por %p333, %p334
      %p337 = scmp.ne.s32.totalorder %s322, %s336
      %p338 = scmp.eq.s32.totalorder %s29, 0
      %p339 = por %p337, %p338
      %s341 = sadd.s32 %s340, 1
      %p344 = scmp.eq.s32.totalorder %s23, 1
      %p345 = scmp.ne.s32.totalorder %s340, %s342
      %p346 = scmp.eq.s32.totalorder %s23, 0
      %p347 = por %p345, %p346
      %p348 = scmp.ne.s32.totalorder %s340, %s342
      %p349 = scmp.eq.s32.totalorder %s28, 1
      %p350 = por %p348, %p349
      %p351 = scmp.ne.s32.totalorder %s342, %s343
      %p352 = scmp.eq.s32.totalorder %s28, 0
      %p353 = por %p351, %p352
      %p354 = scmp.ne.s32.totalorder %s342, %s343
      %p355 = scmp.eq.s32.totalorder %s29, 1
      %p356 = por %p354, %p355
      %p358 = scmp.ne.s32.totalorder %s343, %s357
      %p359 = scmp.eq.s32.totalorder %s29, 0
      %p360 = por %p358, %p359
      %s361 = ssub.s32 %s30, %s42
      %s362 = ssub.s32 %s31, %s38
      %s363 = sor.u32 %s361, %s362
      %p364 = scmp.eq.s32.totalorder %s363, 0
      %s366 = sadd.s32 %s365, 1
      %s367 = scalar_select %p364, %s365, %s366
      %p370 = pneg %p364
      %p371 = scmp.eq.s32.totalorder %s23, 1
      %p372 = por %p370, %p371
      %p373 = scmp.ne.s32.totalorder %s365, %s368
      %p374 = scmp.eq.s32.totalorder %s23, 0
      %p375 = por %p373, %p374
      %p376 = scmp.ne.s32.totalorder %s365, %s368
      %p377 = scmp.eq.s32.totalorder %s28, 1
      %p378 = por %p376, %p377
      %p379 = scmp.ne.s32.totalorder %s368, %s369
      %p380 = scmp.eq.s32.totalorder %s28, 0
      %p381 = por %p379, %p380
      %p382 = scmp.ne.s32.totalorder %s368, %s369
      %p383 = scmp.eq.s32.totalorder %s29, 1
      %p384 = por %p382, %p383
      %p386 = scmp.ne.s32.totalorder %s369, %s385
      %p387 = scmp.eq.s32.totalorder %s29, 0
      %p388 = por %p386, %p387
      %p389 = scmp.le.s32.totalorder 1, %s23
      %p390 = scmp.lt.s32.totalorder %s23, 3
      %p391 = pnand %p389, %p390
      %p392 = pneg %p391
      // Predicated region
      $region9: #{tpu_custom_call.1} parent=5 // pred_check
        _
      $region10: #{tpu_custom_call.1} parent=5 // pred_check_branch
        %394 = sbr.rel (%p391) target = $region12
      $region11: #{tpu_custom_call.1} parent=5 // pred_region
        %s395 = ssub.s32 %s23, 1
        // Predicated region
        $region13: #{tpu_custom_call.1} parent=11 // pred_check
          %p396 = pneg %p164
        $region14: #{tpu_custom_call.1} parent=11 // pred_check_branch
          %398 = sbr.rel (%p396) target = $region16
        $region15: #{tpu_custom_call.1} parent=11 // pred_region
          _
        $region16: #{tpu_custom_call.1} parent=11 // pred_fallthru
          _
        // Predicated region
        $region17: #{tpu_custom_call.1} parent=11 // pred_check
          %p399 = pneg %p185
        $region18: #{tpu_custom_call.1} parent=11 // pred_check_branch
          %401 = sbr.rel (%p399) target = $region20
        $region19: #{tpu_custom_call.1} parent=11 // pred_region
          _
        $region20: #{tpu_custom_call.1} parent=11 // pred_fallthru
          _
        // Predicated region
        $region21: #{tpu_custom_call.1} parent=11 // pred_check
          %p402 = pneg %p206
        $region22: #{tpu_custom_call.1} parent=11 // pred_check_branch
          %404 = sbr.rel (%p402) target = $region24
        $region23: #{tpu_custom_call.1} parent=11 // pred_region
          _
        $region24: #{tpu_custom_call.1} parent=11 // pred_fallthru
          _
        // Predicated region
        $region25: #{tpu_custom_call.1} parent=11 // pred_check
          %p405 = pneg %p227
        $region26: #{tpu_custom_call.1} parent=11 // pred_check_branch
          %407 = sbr.rel (%p405) target = $region28
        $region27: #{tpu_custom_call.1} parent=11 // pred_region
          _
        $region28: #{tpu_custom_call.1} parent=11 // pred_fallthru
          _
        // Predicated region
        $region29: #{tpu_custom_call.1} parent=11 // pred_check
          %p408 = pneg %p248
        $region30: #{tpu_custom_call.1} parent=11 // pred_check_branch
          %410 = sbr.rel (%p408) target = $region32
        $region31: #{tpu_custom_call.1} parent=11 // pred_region
          _
        $region32: #{tpu_custom_call.1} parent=11 // pred_fallthru
          _
        // Predicated region
        $region33: #{tpu_custom_call.1} parent=11 // pred_check
          %p411 = pneg %p269
        $region34: #{tpu_custom_call.1} parent=11 // pred_check_branch
          %413 = sbr.rel (%p411) target = $region36
        $region35: #{tpu_custom_call.1} parent=11 // pred_region
          _
        $region36: #{tpu_custom_call.1} parent=11 // pred_fallthru
          _
        // Predicated region
        $region37: #{tpu_custom_call.1} parent=11 // pred_check
          %p414 = pneg %p290
        $region38: #{tpu_custom_call.1} parent=11 // pred_check_branch
          %416 = sbr.rel (%p414) target = $region40
        $region39: #{tpu_custom_call.1} parent=11 // pred_region
          _
        $region40: #{tpu_custom_call.1} parent=11 // pred_fallthru
          _
        // Predicated region
        $region41: #{tpu_custom_call.1} parent=11 // pred_check
          %p417 = pneg %p311
        $region42: #{tpu_custom_call.1} parent=11 // pred_check_branch
          %419 = sbr.rel (%p417) target = $region44
        $region43: #{tpu_custom_call.1} parent=11 // pred_region
          _
        $region44: #{tpu_custom_call.1} parent=11 // pred_fallthru
          _
        // Predicated region
        $region45: #{tpu_custom_call.1} parent=11 // pred_check
          %p420 = pneg %p332
        $region46: #{tpu_custom_call.1} parent=11 // pred_check_branch
          %422 = sbr.rel (%p420) target = $region48
        $region47: #{tpu_custom_call.1} parent=11 // pred_region
          _
        $region48: #{tpu_custom_call.1} parent=11 // pred_fallthru
          _
        // Predicated region
        $region49: #{tpu_custom_call.1} parent=11 // pred_check
          %p423 = pneg %p353
        $region50: #{tpu_custom_call.1} parent=11 // pred_check_branch
          %425 = sbr.rel (%p423) target = $region52
        $region51: #{tpu_custom_call.1} parent=11 // pred_region
          _
        $region52: #{tpu_custom_call.1} parent=11 // pred_fallthru
          _
      $region12: #{tpu_custom_call.1} parent=5 // pred_fallthru
        _
      %p426 = scmp.lt.s32.totalorder %s23, 2
      // Predicated region
      $region53: #{tpu_custom_call.1} parent=5 // pred_check
        %p427 = pneg %p426
      $region54: #{tpu_custom_call.1} parent=5 // pred_check_branch
        %429 = sbr.rel (%p427) target = $region56
      $region55: #{tpu_custom_call.1} parent=5 // pred_region
        // Predicated region
        $region57: #{tpu_custom_call.1} parent=55 // pred_check
          %p430 = pneg %p57
        $region58: #{tpu_custom_call.1} parent=55 // pred_check_branch
          %432 = sbr.rel (%p430) target = $region60
        $region59: #{tpu_custom_call.1} parent=55 // pred_region
          %p433 = scmp.lt.s32.totalorder %s30, 1
          %s434 = scalar_select %p433, %s30, 1
          %p435 = scmp.lt.s32.totalorder %s31, 0
          %s436 = scalar_select %p435, %s31, 0
          %s437 = sadd.s32 %s436, %s434
          %s438 = smul.addr %s437, 8
          %s439 = scalar_lea.vmem %s0, %s438
        $region60: #{tpu_custom_call.1} parent=55 // pred_fallthru
          _
        // Predicated region
        $region61: #{tpu_custom_call.1} parent=55 // pred_check
          %p440 = pneg %p83
        $region62: #{tpu_custom_call.1} parent=55 // pred_check_branch
          %442 = sbr.rel (%p440) target = $region64
        $region63: #{tpu_custom_call.1} parent=55 // pred_region
          %p443 = scmp.lt.s32.totalorder %s30, 1
          %s444 = scalar_select %p443, %s30, 1
          %s445 = smul.addr %s444, 4
          %s446 = scalar_lea.vmem %s1, %s445
        $region64: #{tpu_custom_call.1} parent=55 // pred_fallthru
          _
        // Predicated region
        $region65: #{tpu_custom_call.1} parent=55 // pred_check
          %p447 = pneg %p111
        $region66: #{tpu_custom_call.1} parent=55 // pred_check_branch
          %449 = sbr.rel (%p447) target = $region68
        $region67: #{tpu_custom_call.1} parent=55 // pred_region
          %p450 = scmp.lt.s32.totalorder %s30, 1
          %s451 = scalar_select %p450, %s30, 1
          %p452 = scmp.lt.s32.totalorder %s31, 0
          %s453 = scalar_select %p452, %s31, 0
          %s454 = sadd.s32 %s453, %s451
          %s455 = smul.addr %s454, 8
          %s456 = scalar_lea.vmem %s2, %s455
        $region68: #{tpu_custom_call.1} parent=55 // pred_fallthru
          _
        // Predicated region
        $region69: #{tpu_custom_call.1} parent=55 // pred_check
          %p457 = pneg %p137
        $region70: #{tpu_custom_call.1} parent=55 // pred_check_branch
          %459 = sbr.rel (%p457) target = $region72
        $region71: #{tpu_custom_call.1} parent=55 // pred_region
          %p460 = scmp.lt.s32.totalorder %s30, 1
          %s461 = scalar_select %p460, %s30, 1
          %s462 = scalar_lea.vmem %s3, %s461
        $region72: #{tpu_custom_call.1} parent=55 // pred_fallthru
          _
      $region56: #{tpu_custom_call.1} parent=5 // pred_fallthru
        _
      %p463 = scmp.le.s32.totalorder 1, %s23
      %p464 = scmp.lt.s32.totalorder %s23, 3
      %p465 = pnand %p463, %p464
      %p466 = pneg %p465
      // Predicated region
      $region73: #{tpu_custom_call.1} parent=5 // pred_check
        _
      $region74: #{tpu_custom_call.1} parent=5 // pred_check_branch
        %468 = sbr.rel (%p465) target = $region76
      $region75: #{tpu_custom_call.1} parent=5 // pred_region
        %s469 = ssub.s32 %s23, 1
        %p470 = scmp.lt.s32.totalorder %s32, 1
        %s471 = scalar_select %p470, %s32, 1
        %p472 = scmp.lt.s32.totalorder %s33, 0
        %s473 = scalar_select %p472, %s33, 0
        %s474 = sadd.s32 %s473, %s471
        %s475 = smul.addr %s474, 8
        %s476 = scalar_lea.vmem %s0, %s475
        %p477 = pneg %p63
        %p478 = pneg %p60
        %p479 = scmp.lt.s32.totalorder %s32, 1
        %s480 = scalar_select %p479, %s32, 1
        %s481 = smul.addr %s480, 4
        %s482 = scalar_lea.vmem %s1, %s481
        %p483 = pneg %p89
        %p484 = pneg %p86
        %p485 = scmp.lt.s32.totalorder %s32, 1
        %s486 = scalar_select %p485, %s32, 1
        %p487 = scmp.lt.s32.totalorder %s33, 0
        %s488 = scalar_select %p487, %s33, 0
        %s489 = sadd.s32 %s488, %s486
        %s490 = smul.addr %s489, 8
        %s491 = scalar_lea.vmem %s2, %s490
        %p492 = pneg %p117
        %p493 = pneg %p114
        %p494 = scmp.lt.s32.totalorder %s32, 1
        %s495 = scalar_select %p494, %s32, 1
        %s496 = scalar_lea.vmem %s3, %s495
        %p497 = pneg %p143
        %p498 = pneg %p140
        %p499 = pneg %p164
        %p500 = pneg %p161
        %p501 = pneg %p185
        %p502 = pneg %p182
        %p503 = pneg %p206
        %p504 = pneg %p203
        %p505 = pneg %p227
        %p506 = pneg %p224
        %p507 = pneg %p248
        %p508 = pneg %p245
        %p509 = pneg %p269
        %p510 = pneg %p266
        %p511 = pneg %p290
        %p512 = pneg %p287
        %p513 = pneg %p311
        %p514 = pneg %p308
        %p515 = pneg %p332
        %p516 = pneg %p329
        %p517 = pneg %p353
        %p518 = pneg %p350
        %p519 = pneg %p381
        %p520 = pneg %p378
        %s521 = sand.u32 %s368, 1
        %s522 = scalar_lea.sflag [#allocation3], %s521
        %s523 = sand.u32 %s368, 1
        %s524 = smul.addr %s523, 8
        %s525 = scalar_lea.vmem [#allocation2], %s524
        %p526 = scmp.lt.s32.totalorder %s32, 1
        %s527 = scalar_select %p526, %s32, 1
        %p528 = scmp.lt.s32.totalorder %s33, 0
        %s529 = scalar_select %p528, %s33, 0
        %s530 = sadd.s32 %s529, %s527
        %s531 = smul.addr %s530, 8
        %s532 = scalar_lea.vmem %s0, %s531
        %p533 = scmp.lt.s32.totalorder %s32, 1
        %s534 = scalar_select %p533, %s32, 1
        %s535 = smul.addr %s534, 4
        %s536 = scalar_lea.vmem %s1, %s535
        %p537 = scmp.lt.s32.totalorder %s32, 1
        %s538 = scalar_select %p537, %s32, 1
        %p539 = scmp.lt.s32.totalorder %s33, 0
        %s540 = scalar_select %p539, %s33, 0
        %s541 = sadd.s32 %s540, %s538
        %s542 = smul.addr %s541, 8
        %s543 = scalar_lea.vmem %s2, %s542
        %p544 = scmp.lt.s32.totalorder %s32, 1
        %s545 = scalar_select %p544, %s32, 1
        %s546 = scalar_lea.vmem %s3, %s545
        %v548 = vld [vmem:[%s532] sm:$0xff]
        %v549 = vld [vmem:[%s536] sm:$0xf]
        %v550 = vld [vmem:[%s4] sm:$0x1]
        %v551 = vld [vmem:[%s5] sm:$0x1]
        %vm552 = vcmask 261120
        %v553 = vsel %vm552, %v548, 0.0
        %554 = vadd.xlane.f32.xlu0 %v553
        %v555 = vpop.xlane.xlu0 %554
        %v556 = vrcp.pop 32.0
        %v557 = vmul.f32 32.0, %v556
        %v558 = vsub.f32 1.0, %v557
        %v559 = vmul.f32 %v556, %v558
        %v560 = vadd.f32 %v556, %v559
        %vm561 = vweird.f32 %v556
        %v562 = vsel %vm561, %v556, %v560
        %v563 = vmul.f32 %v555, %v562
        %v564 = vsub.f32 %v548, %v563
        %v565 = vmul.f32 %v564, %v564
        %v566 = vsel %vm552, %v565, 0.0
        %567 = vadd.xlane.f32.xlu0 %v566
        %v568 = vpop.xlane.xlu0 %567
        %v569 = vmul.f32 %v568, %v562
        %v570 = vadd.f32 %v569, 1e-05
        %v571 = vrsqrt.pop %v570
        %v572 = vmul.f32 %v571, %v570
        %v573 = vmul.f32 %v572, %v571
        %v574 = vmul.f32 0.5, %v573
        %v575 = vsub.f32 1.5, %v574
        %v576 = vmul.f32 %v571, %v575
        %vm577 = vweird.f32 %v570
        %vm578 = vweird.f32 %v571
        %vm579 = vmor %vm577, %vm578
        %v580 = vsel %vm579, %v571, %v576
        %v581 = vmul.f32 %v564, %v580
        %v583 = vperm.slane %v550, 0
        %v585 = vmul.f32 %v581, %v583
        %v587 = vperm.slane %v551, 0
        %v589 = vadd.f32 %v585, %v587
        %v590 = vpack.c.bf16 %v589, %v589
        %v591 = vld [vmem:[%s6] sm:$0xf]
        %v592 = vld [vmem:[%s6 + $0x4] sm:$0xf]
        %v593 = vld [vmem:[%s6 + $0x8] sm:$0xf]
        %v594 = vld [vmem:[%s6 + $0xc] sm:$0xf]
        %v595 = vld [vmem:[%s6 + $0x10] sm:$0xf]
        %v596 = vld [vmem:[%s6 + $0x14] sm:$0xf]
        %v597 = vld [vmem:[%s6 + $0x18] sm:$0xf]
        %v598 = vld [vmem:[%s6 + $0x1c] sm:$0xf]
        %v599 = vld [vmem:[%s6 + $0x20] sm:$0xf]
        %v600 = vld [vmem:[%s6 + $0x24] sm:$0xf]
        %v601 = vld [vmem:[%s6 + $0x28] sm:$0xf]
        %v602 = vld [vmem:[%s6 + $0x2c] sm:$0xf]
        %v603 = vld [vmem:[%s6 + $0x30] sm:$0xf]
        %v604 = vld [vmem:[%s6 + $0x34] sm:$0xf]
        %v605 = vld [vmem:[%s6 + $0x38] sm:$0xf]
        %v606 = vld [vmem:[%s6 + $0x3c] sm:$0xf]
        %v611 = vunpack.c.l.b16 %v591
        %v612 = vunpack.c.l.b16 %v592
        %v613 = vunpack.c.l.b16 %v593
        %v614 = vunpack.c.l.b16 %v594
        %v615 = vpack.c.b16 %v612, %v611
        %v616 = vpack.c.b16 %v614, %v613
        %v620 = vsel %vm552, %v590, 0
        %622 = vmatpush.bf16.msra.mxu0 0
        %623 = vmatpush.bf16.msra.mxu0 0
        %624 = vmatpush.bf16.msra.mxu0 0
        %625 = vmatpush.bf16.msra.mxu0 0
        %626 = vmatpush.bf16.msra.mxu0 0
        %627 = vmatpush.bf16.msra.mxu0 0
        %628 = vmatpush.bf16.msra.mxu0 %v616
        %629 = vmatpush.bf16.msra.mxu0 %v615
        %630 = vmatmul.bf16.gmra.mxu0 %v620
        %v631 = vpop.f32.mrf.mxu0
        %v632 = vadd.f32 0.0, %v631
        %v633 = vpop.f32.mrf.mxu0
        %634 = vdwg.mxu0
        %v639 = vunpack.c.l.b16 %v595
        %v640 = vunpack.c.l.b16 %v596
        %v641 = vunpack.c.l.b16 %v597
        %v642 = vunpack.c.l.b16 %v598
        %v643 = vpack.c.b16 %v640, %v639
        %v644 = vpack.c.b16 %v642, %v641
        %647 = vmatpush.bf16.msra.mxu0 0
        %648 = vmatpush.bf16.msra.mxu0 0
        %649 = vmatpush.bf16.msra.mxu0 0
        %650 = vmatpush.bf16.msra.mxu0 0
        %651 = vmatpush.bf16.msra.mxu0 0
        %652 = vmatpush.bf16.msra.mxu0 0
        %653 = vmatpush.bf16.msra.mxu0 %v644
        %654 = vmatpush.bf16.msra.mxu0 %v643
        %655 = vmatmul.bf16.gmra.mxu0 %v620
        %v656 = vpop.f32.mrf.mxu0
        %v657 = vadd.f32 0.0, %v656
        %v658 = vpop.f32.mrf.mxu0
        %659 = vdwg.mxu0
        %v664 = vunpack.c.l.b16 %v599
        %v665 = vunpack.c.l.b16 %v600
        %v666 = vunpack.c.l.b16 %v601
        %v667 = vunpack.c.l.b16 %v602
        %v668 = vpack.c.b16 %v665, %v664
        %v669 = vpack.c.b16 %v667, %v666
        %672 = vmatpush.bf16.msra.mxu0 0
        %673 = vmatpush.bf16.msra.mxu0 0
        %674 = vmatpush.bf16.msra.mxu0 0
        %675 = vmatpush.bf16.msra.mxu0 0
        %676 = vmatpush.bf16.msra.mxu0 0
        %677 = vmatpush.bf16.msra.mxu0 0
        %678 = vmatpush.bf16.msra.mxu0 %v669
        %679 = vmatpush.bf16.msra.mxu0 %v668
        %680 = vmatmul.bf16.gmra.mxu0 %v620
        %v681 = vpop.f32.mrf.mxu0
        %v682 = vadd.f32 0.0, %v681
        %v683 = vpop.f32.mrf.mxu0
        %684 = vdwg.mxu0
        %v689 = vunpack.c.l.b16 %v603
        %v690 = vunpack.c.l.b16 %v604
        %v691 = vunpack.c.l.b16 %v605
        %v692 = vunpack.c.l.b16 %v606
        %v693 = vpack.c.b16 %v690, %v689
        %v694 = vpack.c.b16 %v692, %v691
        %697 = vmatpush.bf16.msra.mxu0 0
        %698 = vmatpush.bf16.msra.mxu0 0
        %699 = vmatpush.bf16.msra.mxu0 0
        %700 = vmatpush.bf16.msra.mxu0 0
        %701 = vmatpush.bf16.msra.mxu0 0
        %702 = vmatpush.bf16.msra.mxu0 0
        %703 = vmatpush.bf16.msra.mxu0 %v694
        %704 = vmatpush.bf16.msra.mxu0 %v693
        %705 = vmatmul.bf16.gmra.mxu0 %v620
        %v706 = vpop.f32.mrf.mxu0
        %v707 = vadd.f32 0.0, %v706
        %v708 = vpop.f32.mrf.mxu0
        %709 = vdwg.mxu0
        %v710 = vld [vmem:[%s7] sm:$0xf]
        %v711 = vld [vmem:[%s7 + $0x4] sm:$0xf]
        %v712 = vld [vmem:[%s7 + $0x8] sm:$0xf]
        %v713 = vld [vmem:[%s7 + $0xc] sm:$0xf]
        %v714 = vld [vmem:[%s7 + $0x10] sm:$0xf]
        %v715 = vld [vmem:[%s7 + $0x14] sm:$0xf]
        %v716 = vld [vmem:[%s7 + $0x18] sm:$0xf]
        %v717 = vld [vmem:[%s7 + $0x1c] sm:$0xf]
        %v718 = vld [vmem:[%s7 + $0x20] sm:$0xf]
        %v719 = vld [vmem:[%s7 + $0x24] sm:$0xf]
        %v720 = vld [vmem:[%s7 + $0x28] sm:$0xf]
        %v721 = vld [vmem:[%s7 + $0x2c] sm:$0xf]
        %v722 = vld [vmem:[%s7 + $0x30] sm:$0xf]
        %v723 = vld [vmem:[%s7 + $0x34] sm:$0xf]
        %v724 = vld [vmem:[%s7 + $0x38] sm:$0xf]
        %v725 = vld [vmem:[%s7 + $0x3c] sm:$0xf]
        %v730 = vunpack.c.l.b16 %v710
        %v731 = vunpack.c.l.b16 %v711
        %v732 = vunpack.c.l.b16 %v712
        %v733 = vunpack.c.l.b16 %v713
        %v734 = vpack.c.b16 %v731, %v730
        %v735 = vpack.c.b16 %v733, %v732
        %v739 = vsel %vm552, %v549, 0
        %741 = vmatpush.bf16.msra.mxu0 0
        %742 = vmatpush.bf16.msra.mxu0 0
        %743 = vmatpush.bf16.msra.mxu0 0
        %744 = vmatpush.bf16.msra.mxu0 0
        %745 = vmatpush.bf16.msra.mxu0 0
        %746 = vmatpush.bf16.msra.mxu0 0
        %747 = vmatpush.bf16.msra.mxu0 %v735
        %748 = vmatpush.bf16.msra.mxu0 %v734
        %749 = vmatmul.bf16.gmra.mxu0 %v739
        %v750 = vpop.f32.mrf.mxu0
        %v751 = vadd.f32 0.0, %v750
        %v752 = vpop.f32.mrf.mxu0
        %753 = vdwg.mxu0
        %v758 = vunpack.c.l.b16 %v714
        %v759 = vunpack.c.l.b16 %v715
        %v760 = vunpack.c.l.b16 %v716
        %v761 = vunpack.c.l.b16 %v717
        %v762 = vpack.c.b16 %v759, %v758
        %v763 = vpack.c.b16 %v761, %v760
        %766 = vmatpush.bf16.msra.mxu0 0
        %767 = vmatpush.bf16.msra.mxu0 0
        %768 = vmatpush.bf16.msra.mxu0 0
        %769 = vmatpush.bf16.msra.mxu0 0
        %770 = vmatpush.bf16.msra.mxu0 0
        %771 = vmatpush.bf16.msra.mxu0 0
        %772 = vmatpush.bf16.msra.mxu0 %v763
        %773 = vmatpush.bf16.msra.mxu0 %v762
        %774 = vmatmul.bf16.gmra.mxu0 %v739
        %v775 = vpop.f32.mrf.mxu0
        %v776 = vadd.f32 0.0, %v775
        %v777 = vpop.f32.mrf.mxu0
        %778 = vdwg.mxu0
        %v783 = vunpack.c.l.b16 %v718
        %v784 = vunpack.c.l.b16 %v719
        %v785 = vunpack.c.l.b16 %v720
        %v786 = vunpack.c.l.b16 %v721
        %v787 = vpack.c.b16 %v784, %v783
        %v788 = vpack.c.b16 %v786, %v785
        %791 = vmatpush.bf16.msra.mxu0 0
        %792 = vmatpush.bf16.msra.mxu0 0
        %793 = vmatpush.bf16.msra.mxu0 0
        %794 = vmatpush.bf16.msra.mxu0 0
        %795 = vmatpush.bf16.msra.mxu0 0
        %796 = vmatpush.bf16.msra.mxu0 0
        %797 = vmatpush.bf16.msra.mxu0 %v788
        %798 = vmatpush.bf16.msra.mxu0 %v787
        %799 = vmatmul.bf16.gmra.mxu0 %v739
        %v800 = vpop.f32.mrf.mxu0
        %v801 = vadd.f32 0.0, %v800
        %v802 = vpop.f32.mrf.mxu0
        %803 = vdwg.mxu0
        %v808 = vunpack.c.l.b16 %v722
        %v809 = vunpack.c.l.b16 %v723
        %v810 = vunpack.c.l.b16 %v724
        %v811 = vunpack.c.l.b16 %v725
        %v812 = vpack.c.b16 %v809, %v808
        %v813 = vpack.c.b16 %v811, %v810
        %816 = vmatpush.bf16.msra.mxu0 0
        %817 = vmatpush.bf16.msra.mxu0 0
        %818 = vmatpush.bf16.msra.mxu0 0
        %819 = vmatpush.bf16.msra.mxu0 0
        %820 = vmatpush.bf16.msra.mxu0 0
        %821 = vmatpush.bf16.msra.mxu0 0
        %822 = vmatpush.bf16.msra.mxu0 %v813
        %823 = vmatpush.bf16.msra.mxu0 %v812
        %824 = vmatmul.bf16.gmra.mxu0 %v739
        %v825 = vpop.f32.mrf.mxu0
        %v826 = vadd.f32 0.0, %v825
        %v827 = vpop.f32.mrf.mxu0
        %828 = vdwg.mxu0
        %v829 = vld [vmem:[%s8] sm:$0xf]
        %v830 = vld [vmem:[%s8 + $0x4] sm:$0xf]
        %v831 = vld [vmem:[%s8 + $0x8] sm:$0xf]
        %v832 = vld [vmem:[%s8 + $0xc] sm:$0xf]
        %v833 = vld [vmem:[%s8 + $0x10] sm:$0xf]
        %v834 = vld [vmem:[%s8 + $0x14] sm:$0xf]
        %v835 = vld [vmem:[%s8 + $0x18] sm:$0xf]
        %v836 = vld [vmem:[%s8 + $0x1c] sm:$0xf]
        %v837 = vld [vmem:[%s8 + $0x20] sm:$0xf]
        %v838 = vld [vmem:[%s8 + $0x24] sm:$0xf]
        %v839 = vld [vmem:[%s8 + $0x28] sm:$0xf]
        %v840 = vld [vmem:[%s8 + $0x2c] sm:$0xf]
        %v841 = vld [vmem:[%s8 + $0x30] sm:$0xf]
        %v842 = vld [vmem:[%s8 + $0x34] sm:$0xf]
        %v843 = vld [vmem:[%s8 + $0x38] sm:$0xf]
        %v844 = vld [vmem:[%s8 + $0x3c] sm:$0xf]
        %v849 = vunpack.c.l.b16 %v829
        %v850 = vunpack.c.l.b16 %v830
        %v851 = vunpack.c.l.b16 %v831
        %v852 = vunpack.c.l.b16 %v832
        %v853 = vpack.c.b16 %v850, %v849
        %v854 = vpack.c.b16 %v852, %v851
        %857 = vmatpush.bf16.msra.mxu0 0
        %858 = vmatpush.bf16.msra.mxu0 0
        %859 = vmatpush.bf16.msra.mxu0 0
        %860 = vmatpush.bf16.msra.mxu0 0
        %861 = vmatpush.bf16.msra.mxu0 0
        %862 = vmatpush.bf16.msra.mxu0 0
        %863 = vmatpush.bf16.msra.mxu0 %v854
        %864 = vmatpush.bf16.msra.mxu0 %v853
        %865 = vmatmul.bf16.gmra.mxu0 %v739
        %v866 = vpop.f32.mrf.mxu0
        %v867 = vadd.f32 0.0, %v866
        %v868 = vpop.f32.mrf.mxu0
        %869 = vdwg.mxu0
        %v874 = vunpack.c.l.b16 %v833
        %v875 = vunpack.c.l.b16 %v834
        %v876 = vunpack.c.l.b16 %v835
        %v877 = vunpack.c.l.b16 %v836
        %v878 = vpack.c.b16 %v875, %v874
        %v879 = vpack.c.b16 %v877, %v876
        %882 = vmatpush.bf16.msra.mxu0 0
        %883 = vmatpush.bf16.msra.mxu0 0
        %884 = vmatpush.bf16.msra.mxu0 0
        %885 = vmatpush.bf16.msra.mxu0 0
        %886 = vmatpush.bf16.msra.mxu0 0
        %887 = vmatpush.bf16.msra.mxu0 0
        %888 = vmatpush.bf16.msra.mxu0 %v879
        %889 = vmatpush.bf16.msra.mxu0 %v878
        %890 = vmatmul.bf16.gmra.mxu0 %v739
        %v891 = vpop.f32.mrf.mxu0
        %v892 = vadd.f32 0.0, %v891
        %v893 = vpop.f32.mrf.mxu0
        %894 = vdwg.mxu0
        %v899 = vunpack.c.l.b16 %v837
        %v900 = vunpack.c.l.b16 %v838
        %v901 = vunpack.c.l.b16 %v839
        %v902 = vunpack.c.l.b16 %v840
        %v903 = vpack.c.b16 %v900, %v899
        %v904 = vpack.c.b16 %v902, %v901
        %907 = vmatpush.bf16.msra.mxu0 0
        %908 = vmatpush.bf16.msra.mxu0 0
        %909 = vmatpush.bf16.msra.mxu0 0
        %910 = vmatpush.bf16.msra.mxu0 0
        %911 = vmatpush.bf16.msra.mxu0 0
        %912 = vmatpush.bf16.msra.mxu0 0
        %913 = vmatpush.bf16.msra.mxu0 %v904
        %914 = vmatpush.bf16.msra.mxu0 %v903
        %915 = vmatmul.bf16.gmra.mxu0 %v739
        %v916 = vpop.f32.mrf.mxu0
        %v917 = vadd.f32 0.0, %v916
        %v918 = vpop.f32.mrf.mxu0
        %919 = vdwg.mxu0
        %v924 = vunpack.c.l.b16 %v841
        %v925 = vunpack.c.l.b16 %v842
        %v926 = vunpack.c.l.b16 %v843
        %v927 = vunpack.c.l.b16 %v844
        %v928 = vpack.c.b16 %v925, %v924
        %v929 = vpack.c.b16 %v927, %v926
        %932 = vmatpush.bf16.msra.mxu0 0
        %933 = vmatpush.bf16.msra.mxu0 0
        %934 = vmatpush.bf16.msra.mxu0 0
        %935 = vmatpush.bf16.msra.mxu0 0
        %936 = vmatpush.bf16.msra.mxu0 0
        %937 = vmatpush.bf16.msra.mxu0 0
        %938 = vmatpush.bf16.msra.mxu0 %v929
        %939 = vmatpush.bf16.msra.mxu0 %v928
        %940 = vmatmul.bf16.gmra.mxu0 %v739
        %v941 = vpop.f32.mrf.mxu0
        %v942 = vadd.f32 0.0, %v941
        %v943 = vpop.f32.mrf.mxu0
        %944 = vdwg.mxu0
        %v945 = vpack.c.bf16 %v632, %v632
        %v946 = vpack.c.bf16 %v657, %v657
        %v947 = vpack.c.bf16 %v682, %v682
        %v948 = vpack.c.bf16 %v707, %v707
        %v949 = vpack.c.bf16 %v751, %v751
        %v950 = vpack.c.bf16 %v776, %v776
        %v951 = vpack.c.bf16 %v801, %v801
        %v952 = vpack.c.bf16 %v826, %v826
        %vm953 = vcmask 64512
        %v955 = vsel %vm953, %v945, 0
        %v958 = vsel %vm953, %v949, 0
        %960 = vmatpush.bf16.xpose.msra.mxu0 0
        %961 = vmatpush.bf16.xpose.msra.mxu0 0
        %962 = vmatpush.bf16.xpose.msra.mxu0 0
        %963 = vmatpush.bf16.xpose.msra.mxu0 0
        %964 = vmatpush.bf16.xpose.msra.mxu0 0
        %965 = vmatpush.bf16.xpose.msra.mxu0 0
        %966 = vmatpush.bf16.xpose.msra.mxu0 0
        %967 = vmatpush.bf16.xpose.msra.mxu0 %v958
        %968 = vmatmul.bf16.gmra.mxu0 %v955
        %v969 = vpop.f32.mrf.mxu0
        %v970 = vadd.f32 0.0, %v969
        %v971 = vpop.f32.mrf.mxu0
        %972 = vdwg.mxu0
        %v974 = vsel %vm953, %v946, 0
        %v977 = vsel %vm953, %v950, 0
        %979 = vmatpush.bf16.xpose.msra.mxu0 0
        %980 = vmatpush.bf16.xpose.msra.mxu0 0
        %981 = vmatpush.bf16.xpose.msra.mxu0 0
        %982 = vmatpush.bf16.xpose.msra.mxu0 0
        %983 = vmatpush.bf16.xpose.msra.mxu0 0
        %984 = vmatpush.bf16.xpose.msra.mxu0 0
        %985 = vmatpush.bf16.xpose.msra.mxu0 0
        %986 = vmatpush.bf16.xpose.msra.mxu0 %v977
        %987 = vmatmul.bf16.gmra.mxu0 %v974
        %v988 = vpop.f32.mrf.mxu0
        %v989 = vadd.f32 0.0, %v988
        %v990 = vpop.f32.mrf.mxu0
        %991 = vdwg.mxu0
        %v993 = vsel %vm953, %v947, 0
        %v996 = vsel %vm953, %v951, 0
        %998 = vmatpush.bf16.xpose.msra.mxu0 0
        %999 = vmatpush.bf16.xpose.msra.mxu0 0
        %1000 = vmatpush.bf16.xpose.msra.mxu0 0
        %1001 = vmatpush.bf16.xpose.msra.mxu0 0
        %1002 = vmatpush.bf16.xpose.msra.mxu0 0
        %1003 = vmatpush.bf16.xpose.msra.mxu0 0
        %1004 = vmatpush.bf16.xpose.msra.mxu0 0
        %1005 = vmatpush.bf16.xpose.msra.mxu0 %v996
        %1006 = vmatmul.bf16.gmra.mxu0 %v993
        %v1007 = vpop.f32.mrf.mxu0
        %v1008 = vadd.f32 0.0, %v1007
        %v1009 = vpop.f32.mrf.mxu0
        %1010 = vdwg.mxu0
        %v1012 = vsel %vm953, %v948, 0
        %v1015 = vsel %vm953, %v952, 0
        %1017 = vmatpush.bf16.xpose.msra.mxu0 0
        %1018 = vmatpush.bf16.xpose.msra.mxu0 0
        %1019 = vmatpush.bf16.xpose.msra.mxu0 0
        %1020 = vmatpush.bf16.xpose.msra.mxu0 0
        %1021 = vmatpush.bf16.xpose.msra.mxu0 0
        %1022 = vmatpush.bf16.xpose.msra.mxu0 0
        %1023 = vmatpush.bf16.xpose.msra.mxu0 0
        %1024 = vmatpush.bf16.xpose.msra.mxu0 %v1015
        %1025 = vmatmul.bf16.gmra.mxu0 %v1012
        %v1026 = vpop.f32.mrf.mxu0
        %v1027 = vadd.f32 0.0, %v1026
        %v1028 = vpop.f32.mrf.mxu0
        %1029 = vdwg.mxu0
        %v1030 = vld [vmem:[%s543] sm:$0xff]
        %v1031 = vld [vmem:[%s546] sm:$0x1]
        %1032 = vset.pattern.permute.xlu0 0
        %1033 = vperm.xlu0 %1032, %v1030
        %v1034 = vpop.permute.xlu0 %1033
        %v1035 = vperm.slane %v1031, 0
        %vm1036 = vcmp.ge.s32.totalorder %v1034, %v1035
        %v1037 = vsel %vm1036, 1, 0
        %vm1038 = vcmp.eq.s32.totalorder %v1037, 1
        %v1039 = vsel %vm1038, %v970, -3.4028235e+38
        %v1040 = vsel %vm1038, %v989, -3.4028235e+38
        %v1041 = vsel %vm1038, %v1008, -3.4028235e+38
        %v1042 = vsel %vm1038, %v1027, -3.4028235e+38
        %v1043 = vsel %vm953, %v1039, -inf
        %1044 = vmax.xlane.f32.xlu0 %v1043
        %v1045 = vpop.xlane.xlu0 %1044
        %v1046 = vsel %vm953, %v1040, -inf
        %1047 = vmax.xlane.f32.xlu0 %v1046
        %v1048 = vpop.xlane.xlu0 %1047
        %v1049 = vsel %vm953, %v1041, -inf
        %1050 = vmax.xlane.f32.xlu0 %v1049
        %v1051 = vpop.xlane.xlu0 %1050
        %v1052 = vsel %vm953, %v1042, -inf
        %1053 = vmax.xlane.f32.xlu0 %v1052
        %v1054 = vpop.xlane.xlu0 %1053
        %v1055 = vsub.f32 %v1039, %v1045
        %v1056 = vsub.f32 %v1040, %v1048
        %v1057 = vsub.f32 %v1041, %v1051
        %v1058 = vsub.f32 %v1042, %v1054
        %v1059 = vmul.f32 %v1055, 1.442695
        %v1060 = vpow.pop %v1059
        %v1061 = vmul.f32 %v1056, 1.442695
        %v1062 = vpow.pop %v1061
        %v1063 = vmul.f32 %v1057, 1.442695
        %v1064 = vpow.pop %v1063
        %v1065 = vmul.f32 %v1058, 1.442695
        %v1066 = vpow.pop %v1065
        %v1067 = vsel %vm953, %v1060, 0.0
        %1068 = vadd.xlane.f32.xlu0 %v1067
        %v1069 = vpop.xlane.xlu0 %1068
        %v1070 = vsel %vm953, %v1062, 0.0
        %1071 = vadd.xlane.f32.xlu0 %v1070
        %v1072 = vpop.xlane.xlu0 %1071
        %v1073 = vsel %vm953, %v1064, 0.0
        %1074 = vadd.xlane.f32.xlu0 %v1073
        %v1075 = vpop.xlane.xlu0 %1074
        %v1076 = vsel %vm953, %v1066, 0.0
        %1077 = vadd.xlane.f32.xlu0 %v1076
        %v1078 = vpop.xlane.xlu0 %1077
        %v1079 = vrcp.pop %v1069
        %v1080 = vrcp.pop %v1072
        %v1081 = vrcp.pop %v1075
        %v1082 = vrcp.pop %v1078
        %v1083 = vmul.f32 %v1060, %v1079
        %v1084 = vmul.f32 %v1062, %v1080
        %v1085 = vmul.f32 %v1064, %v1081
        %v1086 = vmul.f32 %v1066, %v1082
        %v1087 = vpack.c.bf16 %v1083, %v1083
        %v1088 = vpack.c.bf16 %v1084, %v1084
        %v1089 = vpack.c.bf16 %v1085, %v1085
        %v1090 = vpack.c.bf16 %v1086, %v1086
        %v1091 = vpack.c.bf16 %v867, %v867
        %v1092 = vpack.c.bf16 %v892, %v892
        %v1093 = vpack.c.bf16 %v917, %v917
        %v1094 = vpack.c.bf16 %v942, %v942
        %v1096 = vsel %vm953, %v1087, 0
        %vm1098 = vcmask 1043456
        %v1100 = vsel %vm1098, %v1091, 0
        %1102 = vmatpush.bf16.msra.mxu0 0
        %1103 = vmatpush.bf16.msra.mxu0 0
        %1104 = vmatpush.bf16.msra.mxu0 0
        %1105 = vmatpush.bf16.msra.mxu0 0
        %1106 = vmatpush.bf16.msra.mxu0 0
        %1107 = vmatpush.bf16.msra.mxu0 0
        %1108 = vmatpush.bf16.msra.mxu0 0
        %1109 = vmatpush.bf16.msra.mxu0 %v1100
        %1110 = vmatmul.bf16.gmra.mxu0 %v1096
        %v1111 = vpop.f32.mrf.mxu0
        %v1112 = vadd.f32 0.0, %v1111
        %v1113 = vpop.f32.mrf.mxu0
        %1114 = vdwg.mxu0
        %v1116 = vsel %vm953, %v1088, 0
        %v1119 = vsel %vm1098, %v1092, 0
        %1121 = vmatpush.bf16.msra.mxu0 0
        %1122 = vmatpush.bf16.msra.mxu0 0
        %1123 = vmatpush.bf16.msra.mxu0 0
        %1124 = vmatpush.bf16.msra.mxu0 0
        %1125 = vmatpush.bf16.msra.mxu0 0
        %1126 = vmatpush.bf16.msra.mxu0 0
        %1127 = vmatpush.bf16.msra.mxu0 0
        %1128 = vmatpush.bf16.msra.mxu0 %v1119
        %1129 = vmatmul.bf16.gmra.mxu0 %v1116
        %v1130 = vpop.f32.mrf.mxu0
        %v1131 = vadd.f32 0.0, %v1130
        %v1132 = vpop.f32.mrf.mxu0
        %1133 = vdwg.mxu0
        %v1135 = vsel %vm953, %v1089, 0
        %v1138 = vsel %vm1098, %v1093, 0
        %1140 = vmatpush.bf16.msra.mxu0 0
        %1141 = vmatpush.bf16.msra.mxu0 0
        %1142 = vmatpush.bf16.msra.mxu0 0
        %1143 = vmatpush.bf16.msra.mxu0 0
        %1144 = vmatpush.bf16.msra.mxu0 0
        %1145 = vmatpush.bf16.msra.mxu0 0
        %1146 = vmatpush.bf16.msra.mxu0 0
        %1147 = vmatpush.bf16.msra.mxu0 %v1138
        %1148 = vmatmul.bf16.gmra.mxu0 %v1135
        %v1149 = vpop.f32.mrf.mxu0
        %v1150 = vadd.f32 0.0, %v1149
        %v1151 = vpop.f32.mrf.mxu0
        %1152 = vdwg.mxu0
        %v1154 = vsel %vm953, %v1090, 0
        %v1157 = vsel %vm1098, %v1094, 0
        %1159 = vmatpush.bf16.msra.mxu0 0
        %1160 = vmatpush.bf16.msra.mxu0 0
        %1161 = vmatpush.bf16.msra.mxu0 0
        %1162 = vmatpush.bf16.msra.mxu0 0
        %1163 = vmatpush.bf16.msra.mxu0 0
        %1164 = vmatpush.bf16.msra.mxu0 0
        %1165 = vmatpush.bf16.msra.mxu0 0
        %1166 = vmatpush.bf16.msra.mxu0 %v1157
        %1167 = vmatmul.bf16.gmra.mxu0 %v1154
        %v1168 = vpop.f32.mrf.mxu0
        %v1169 = vadd.f32 0.0, %v1168
        %v1170 = vpop.f32.mrf.mxu0
        %1171 = vdwg.mxu0
        %v1172 = vpack.c.bf16 %v1112, %v1112
        %v1173 = vpack.c.bf16 %v1131, %v1131
        %v1174 = vpack.c.bf16 %v1150, %v1150
        %v1175 = vpack.c.bf16 %v1169, %v1169
        %v1176 = vld [vmem:[%s9] sm:$0xf]
        %v1177 = vld [vmem:[%s9 + $0x4] sm:$0xf]
        %v1178 = vld [vmem:[%s9 + $0x8] sm:$0xf]
        %v1179 = vld [vmem:[%s9 + $0xc] sm:$0xf]
        %v1181 = vsel %vm953, %v1172, 0
        %v1184 = vsel %vm1098, %v1176, 0
        %1186 = vmatpush.bf16.msra.mxu0 0
        %1187 = vmatpush.bf16.msra.mxu0 0
        %1188 = vmatpush.bf16.msra.mxu0 0
        %1189 = vmatpush.bf16.msra.mxu0 0
        %1190 = vmatpush.bf16.msra.mxu0 0
        %1191 = vmatpush.bf16.msra.mxu0 0
        %1192 = vmatpush.bf16.msra.mxu0 0
        %1193 = vmatpush.bf16.msra.mxu0 %v1184
        %1194 = vmatmul.bf16.gmra.mxu0 %v1181
        %v1195 = vpop.f32.mrf.mxu0
        %v1196 = vadd.f32 0.0, %v1195
        %v1197 = vpop.f32.mrf.mxu0
        %1198 = vdwg.mxu0
        %v1200 = vsel %vm953, %v1173, 0
        %v1203 = vsel %vm1098, %v1177, 0
        %1205 = vmatpush.bf16.msra.mxu0 0
        %1206 = vmatpush.bf16.msra.mxu0 0
        %1207 = vmatpush.bf16.msra.mxu0 0
        %1208 = vmatpush.bf16.msra.mxu0 0
        %1209 = vmatpush.bf16.msra.mxu0 0
        %1210 = vmatpush.bf16.msra.mxu0 0
        %1211 = vmatpush.bf16.msra.mxu0 0
        %1212 = vmatpush.bf16.msra.mxu0 %v1203
        %1213 = vmatmul.bf16.gmra.mxu0 %v1200
        %v1214 = vpop.f32.mrf.mxu0
        %v1215 = vadd.f32 0.0, %v1214
        %v1216 = vpop.f32.mrf.mxu0
        %1217 = vdwg.mxu0
        %v1219 = vsel %vm953, %v1174, 0
        %v1222 = vsel %vm1098, %v1178, 0
        %1224 = vmatpush.bf16.msra.mxu0 0
        %1225 = vmatpush.bf16.msra.mxu0 0
        %1226 = vmatpush.bf16.msra.mxu0 0
        %1227 = vmatpush.bf16.msra.mxu0 0
        %1228 = vmatpush.bf16.msra.mxu0 0
        %1229 = vmatpush.bf16.msra.mxu0 0
        %1230 = vmatpush.bf16.msra.mxu0 0
        %1231 = vmatpush.bf16.msra.mxu0 %v1222
        %1232 = vmatmul.bf16.gmra.mxu0 %v1219
        %v1233 = vpop.f32.mrf.mxu0
        %v1234 = vadd.f32 0.0, %v1233
        %v1235 = vpop.f32.mrf.mxu0
        %1236 = vdwg.mxu0
        %v1238 = vsel %vm953, %v1175, 0
        %v1241 = vsel %vm1098, %v1179, 0
        %1243 = vmatpush.bf16.msra.mxu0 0
        %1244 = vmatpush.bf16.msra.mxu0 0
        %1245 = vmatpush.bf16.msra.mxu0 0
        %1246 = vmatpush.bf16.msra.mxu0 0
        %1247 = vmatpush.bf16.msra.mxu0 0
        %1248 = vmatpush.bf16.msra.mxu0 0
        %1249 = vmatpush.bf16.msra.mxu0 0
        %1250 = vmatpush.bf16.msra.mxu0 %v1241
        %1251 = vmatmul.bf16.gmra.mxu0 %v1238
        %v1252 = vpop.f32.mrf.mxu0
        %v1253 = vadd.f32 0.0, %v1252
        %v1254 = vpop.f32.mrf.mxu0
        %1255 = vdwg.mxu0
        %v1256 = vsel %vm552, %v1196, 0.0
        %v1257 = vsel %vm552, %v1215, 0.0
        %v1258 = vadd.f32 %v1256, %v1257
        %v1259 = vsel %vm552, %v1234, 0.0
        %v1260 = vadd.f32 %v1258, %v1259
        %v1261 = vsel %vm552, %v1253, 0.0
        %v1262 = vadd.f32 %v1260, %v1261
        %v1263 = vadd.f32 %v1262, %v548
        %v1264 = vld [vmem:[%s10] sm:$0x1]
        %v1265 = vld [vmem:[%s11] sm:$0x1]
        %v1266 = vsel %vm552, %v1263, 0.0
        %1267 = vadd.xlane.f32.xlu0 %v1266
        %v1268 = vpop.xlane.xlu0 %1267
        %v1269 = vmul.f32 %v1268, %v562
        %v1270 = vsub.f32 %v1263, %v1269
        %v1271 = vmul.f32 %v1270, %v1270
        %v1272 = vsel %vm552, %v1271, 0.0
        %1273 = vadd.xlane.f32.xlu0 %v1272
        %v1274 = vpop.xlane.xlu0 %1273
        %v1275 = vmul.f32 %v1274, %v562
        %v1276 = vadd.f32 %v1275, 1e-05
        %v1277 = vrsqrt.pop %v1276
        %v1278 = vmul.f32 %v1277, %v1276
        %v1279 = vmul.f32 %v1278, %v1277
        %v1280 = vmul.f32 0.5, %v1279
        %v1281 = vsub.f32 1.5, %v1280
        %v1282 = vmul.f32 %v1277, %v1281
        %vm1283 = vweird.f32 %v1276
        %vm1284 = vweird.f32 %v1277
        %vm1285 = vmor %vm1283, %vm1284
        %v1286 = vsel %vm1285, %v1277, %v1282
        %v1287 = vmul.f32 %v1270, %v1286
        %v1289 = vperm.slane %v1264, 0
        %v1291 = vmul.f32 %v1287, %v1289
        %v1293 = vperm.slane %v1265, 0
        %v1295 = vadd.f32 %v1291, %v1293
        %v1296 = vpack.c.bf16 %v1295, %v1295
        %v1297 = vld [vmem:[%s12] sm:$0xf]
        %v1298 = vld [vmem:[%s12 + $0x4] sm:$0xf]
        %v1299 = vld [vmem:[%s12 + $0x8] sm:$0xf]
        %v1300 = vld [vmem:[%s12 + $0xc] sm:$0xf]
        %v1305 = vunpack.c.l.b16 %v1297
        %v1306 = vunpack.c.l.b16 %v1298
        %v1307 = vunpack.c.l.b16 %v1299
        %v1308 = vunpack.c.l.b16 %v1300
        %v1309 = vpack.c.b16 %v1306, %v1305
        %v1310 = vpack.c.b16 %v1308, %v1307
        %v1314 = vsel %vm552, %v1296, 0
        %1316 = vmatpush.bf16.msra.mxu0 0
        %1317 = vmatpush.bf16.msra.mxu0 0
        %1318 = vmatpush.bf16.msra.mxu0 0
        %1319 = vmatpush.bf16.msra.mxu0 0
        %1320 = vmatpush.bf16.msra.mxu0 0
        %1321 = vmatpush.bf16.msra.mxu0 0
        %1322 = vmatpush.bf16.msra.mxu0 %v1310
        %1323 = vmatpush.bf16.msra.mxu0 %v1309
        %1324 = vmatmul.bf16.gmra.mxu0 %v1314
        %v1325 = vpop.f32.mrf.mxu0
        %v1326 = vadd.f32 0.0, %v1325
        %v1327 = vpop.f32.mrf.mxu0
        %1328 = vdwg.mxu0
        %v1329 = vmul.f32 %v1326, 0.5
        %v1330 = vmul.f32 %v1326, 0.70710677
        %v1331 = vmul.f32 %v1330, %v1330
        %v1332 = vmin.f32 16.0, %v1331
        %v1333 = vmul.f32 %v1332, 2.1237322e-06
        %v1334 = vadd.f32 %v1333, 0.00028619796
        %v1335 = vmul.f32 %v1332, %v1334
        %v1336 = vadd.f32 %v1335, 0.0036580483
        %v1337 = vmul.f32 %v1332, %v1336
        %v1338 = vadd.f32 %v1337, 0.05243302
        %v1339 = vmul.f32 %v1332, %v1338
        %v1340 = vadd.f32 %v1339, 0.18741608
        %v1341 = vmul.f32 %v1332, %v1340
        %v1342 = vadd.f32 %v1341, 1.1283791
        %v1343 = vmul.f32 %v1330, %v1342
        %v1344 = vmul.f32 %v1332, 3.8918573e-05
        %v1345 = vadd.f32 %v1344, 0.001143296
        %v1346 = vmul.f32 %v1332, %v1345
        %v1347 = vadd.f32 %v1346, 0.014752088
        %v1348 = vmul.f32 %v1332, %v1347
        %v1349 = vadd.f32 %v1348, 0.112945676
        %v1350 = vmul.f32 %v1332, %v1349
        %v1351 = vadd.f32 %v1350, 0.4994258
        %v1352 = vmul.f32 %v1332, %v1351
        %v1353 = vadd.f32 %v1352, 1.0
        %v1354 = vrcp.pop %v1353
        %v1355 = vmul.f32 %v1353, %v1354
        %v1356 = vsub.f32 1.0, %v1355
        %v1357 = vmul.f32 %v1354, %v1356
        %v1358 = vadd.f32 %v1354, %v1357
        %vm1359 = vweird.f32 %v1353
        %vm1360 = vweird.f32 %v1354
        %vm1361 = vmor %vm1359, %vm1360
        %v1362 = vsel %vm1361, %v1354, %v1358
        %v1363 = vand.u32 2147483647, %v1353
        %vm1364 = vcmp.eq.f32.partialorder %v1363, 8.507059e+37
        %v1365 = vand.u32 %v1353, 2147483648
        %v1366 = vor.u32 1.1754944e-38, %v1365
        %v1367 = vsel %vm1364, %v1366, %v1362
        %v1368 = vmul.f32 %v1343, %v1367
        %v1369 = vmin.f32 %v1368, 1.0
        %v1370 = vmax.f32 %v1369, -1.0
        %v1371 = vadd.f32 %v1370, 1.0
        %v1372 = vmul.f32 %v1329, %v1371
        %v1373 = vpack.c.bf16 %v1372, %v1372
        %v1374 = vld [vmem:[%s13] sm:$0xf]
        %v1375 = vld [vmem:[%s13 + $0x4] sm:$0xf]
        %v1376 = vld [vmem:[%s13 + $0x8] sm:$0xf]
        %v1377 = vld [vmem:[%s13 + $0xc] sm:$0xf]
        %v1378 = vld [vmem:[%s13 + $0x10] sm:$0xf]
        %v1379 = vld [vmem:[%s13 + $0x14] sm:$0xf]
        %v1380 = vld [vmem:[%s13 + $0x18] sm:$0xf]
        %v1381 = vld [vmem:[%s13 + $0x1c] sm:$0xf]
        %v1382 = vld [vmem:[%s13 + $0x20] sm:$0xf]
        %v1383 = vld [vmem:[%s13 + $0x24] sm:$0xf]
        %v1384 = vld [vmem:[%s13 + $0x28] sm:$0xf]
        %v1385 = vld [vmem:[%s13 + $0x2c] sm:$0xf]
        %v1386 = vld [vmem:[%s13 + $0x30] sm:$0xf]
        %v1387 = vld [vmem:[%s13 + $0x34] sm:$0xf]
        %v1388 = vld [vmem:[%s13 + $0x38] sm:$0xf]
        %v1389 = vld [vmem:[%s13 + $0x3c] sm:$0xf]
        %v1406 = vunpack.c.l.b16 %v1374
        %v1407 = vunpack.c.l.b16 %v1375
        %v1408 = vunpack.c.l.b16 %v1376
        %v1409 = vunpack.c.l.b16 %v1377
        %v1410 = vunpack.c.l.b16 %v1378
        %v1411 = vunpack.c.l.b16 %v1379
        %v1412 = vunpack.c.l.b16 %v1380
        %v1413 = vunpack.c.l.b16 %v1381
        %v1414 = vunpack.c.l.b16 %v1382
        %v1415 = vunpack.c.l.b16 %v1383
        %v1416 = vunpack.c.l.b16 %v1384
        %v1417 = vunpack.c.l.b16 %v1385
        %v1418 = vunpack.c.l.b16 %v1386
        %v1419 = vunpack.c.l.b16 %v1387
        %v1420 = vunpack.c.l.b16 %v1388
        %v1421 = vunpack.c.l.b16 %v1389
        %v1422 = vpack.c.b16 %v1407, %v1406
        %v1423 = vpack.c.b16 %v1409, %v1408
        %v1424 = vpack.c.b16 %v1411, %v1410
        %v1425 = vpack.c.b16 %v1413, %v1412
        %v1426 = vpack.c.b16 %v1415, %v1414
        %v1427 = vpack.c.b16 %v1417, %v1416
        %v1428 = vpack.c.b16 %v1419, %v1418
        %v1429 = vpack.c.b16 %v1421, %v1420
        %1438 = vmatpush.bf16.msra.mxu0 %v1429
        %1439 = vmatpush.bf16.msra.mxu0 %v1428
        %1440 = vmatpush.bf16.msra.mxu0 %v1427
        %1441 = vmatpush.bf16.msra.mxu0 %v1426
        %1442 = vmatpush.bf16.msra.mxu0 %v1425
        %1443 = vmatpush.bf16.msra.mxu0 %v1424
        %1444 = vmatpush.bf16.msra.mxu0 %v1423
        %1445 = vmatpush.bf16.msra.mxu0 %v1422
        %1446 = vmatmul.bf16.gmra.mxu0 %v1373
        %v1447 = vpop.f32.mrf.mxu0
        %v1448 = vadd.f32 %v1263, %v1447
        %v1449 = vpop.f32.mrf.mxu0
        %1450 = vdwg.mxu0
        %1451 = vst.msk [vmem:[%s525] sm:$0xff] %vm552, %v1448
        %s1452 = sand.u32 %s368, 1
        %s1453 = scalar_lea.sflag [#allocation3], %s1452
        %s1454 = sand.u32 %s368, 1
        %s1455 = smul.addr %s1454, 8
        %s1456 = scalar_lea.vmem [#allocation2], %s1455
        // Predicated region
        $region77: #{tpu_custom_call.1} parent=75 // pred_check
          %p1457 = pneg %p378
        $region78: #{tpu_custom_call.1} parent=75 // pred_check_branch
          %1459 = sbr.rel (%p1457) target = $region80
        $region79: #{tpu_custom_call.1} parent=75 // pred_region
          %1461 = vsyncadd %s1453, 0
          %s1462 = sadd.s32 %s33, %s32
          %s1463 = smul.addr %s1462, 8
          %s1464 = scalar_lea.hbm %s14, %s1463
          %s1466 = sshll.u32 %s1456, 4
          %s1467 = int_to_ptr.vmem [resolvable:$true] %s1466
          %s1468 = sshll.u32 %s1464, 4
          %s1469 = int_to_ptr.hbm [resolvable:$true] %s1468
          %1471 = dma.vmem_to_hbm [thread:$0]  %s1467, 128, %s1469, %s1453
        $region80: #{tpu_custom_call.1} parent=75 // pred_fallthru
          _
      $region76: #{tpu_custom_call.1} parent=5 // pred_fallthru
        _
      %p1472 = scmp.le.s32.totalorder 2, %s23
      // Predicated region
      $region81: #{tpu_custom_call.1} parent=5 // pred_check
        %p1473 = pneg %p1472
      $region82: #{tpu_custom_call.1} parent=5 // pred_check_branch
        %1475 = sbr.rel (%p1473) target = $region84
      $region83: #{tpu_custom_call.1} parent=5 // pred_region
        %s1476 = ssub.s32 %s23, 2
        // Predicated region
        $region85: #{tpu_custom_call.1} parent=83 // pred_check
          %p1477 = pneg %p384
        $region86: #{tpu_custom_call.1} parent=83 // pred_check_branch
          %1479 = sbr.rel (%p1477) target = $region88
        $region87: #{tpu_custom_call.1} parent=83 // pred_region
          %s1480 = sand.u32 %s369, 1
          %s1481 = scalar_lea.sflag [#allocation3], %s1480
          %s1482 = sand.u32 %s369, 1
          %s1483 = smul.addr %s1482, 8
          %s1484 = scalar_lea.vmem [#allocation2], %s1483
          %1486 = dma.done %s1481, 128
        $region88: #{tpu_custom_call.1} parent=83 // pred_fallthru
          _
      $region84: #{tpu_custom_call.1} parent=5 // pred_fallthru
        _
    $region6: #{tpu_custom_call.1} parent=1 // loop_footer
      %s27 = sadd.s32 1, %s23
    $region7: #{tpu_custom_call.1} parent=1 // loop_footer_branch
      %22 = sbr.rel target = $region3
    $region8: #{tpu_custom_call.1} parent=1 // loop_exit
      _
    %1487 = vsyncpa [#allocation3], 1
    %s1488 = scalar_lea.sflag [#allocation3], 1
    %1489 = vsyncpa %s1488, 1

</llo_original>
